<compile_context>
chip_gen: v5e
topology: v5e:2x2
jax: 0.10.0
libtpu: 0.0.40
codegen_flags: <defaults>
</compile_context>

<pallas_src>
import functools

import jax
import jax.numpy as jnp
from jax.experimental import pallas as pl
from jax.experimental.pallas import tpu as pltpu


def _round_up(x, m):
    return ((x + m - 1) // m) * m


# ----------------------------------------------------------------------------
# General fused multi-branch ConvLayer kernel.
#
# A "call" computes B conv branches.  Branch b reads input `input_index[b]`
# (all inputs share N, H, W and are reflect-padded with the call-wide maximum
# dilation D and flattened to rows r = y*WpD + x), applies a dilated 3x3 conv
# with its own dilation d via 9 accumulating bf16 MXU matmuls, and the results
# are concatenated along Cout before a shared epilogue:
#   [bias] -> [InstanceNorm (masked exact stats)] -> [LeakyReLU | sigmoid]
# ----------------------------------------------------------------------------
@functools.lru_cache(maxsize=None)
def _fused_conv_call(N, H, W, D, cins, branches, use_norm, act, out_dtype_name):
    WpD = W + 2 * D                         # padded width (max dilation)
    M_out = _round_up(H * WpD, 8)           # flat output rows computed
    M_in = _round_up(M_out + 2 * D * WpD + 2 * D, 8)
    inv_cnt = 1.0 / float(H * W)
    n_in, n_br = len(cins), len(branches)
    cout_total = sum(c for (_, _, c) in branches)
    out_dtype = jnp.dtype(out_dtype_name)

    def _offsets(d):
        # tap (dy, dx) of a dilation-d conv inside the D-padded flat window
        return tuple((dy * d + D - d) * WpD + dx * d + (D - d)
                     for dy in range(3) for dx in range(3))

    br_offs = tuple(_offsets(d) for (_, d, _) in branches)

    def kernel(*refs):
        x_refs = refs[:n_in]
        w_refs = refs[n_in:n_in + n_br]
        rest = refs[n_in + n_br:]
        if use_norm:
            g_ref, bt_ref, m_ref, o_ref = rest
        else:
            b_ref, o_ref = rest

        parts = []
        for bi, (inp_idx, _, _) in enumerate(branches):
            xr, wr = x_refs[inp_idx], w_refs[bi]
            acc_b = None
            for t, off in enumerate(br_offs[bi]):
                tap = xr[0, off:off + M_out, :].astype(jnp.bfloat16)
                part = jnp.dot(tap, wr[t], preferred_element_type=jnp.float32)
                acc_b = part if acc_b is None else acc_b + part
            parts.append(acc_b)
        acc = parts[0] if n_br == 1 else jnp.concatenate(parts, axis=-1)

        if use_norm:
            # InstanceNorm2d (biased var, eps=1e-5) over the H*W valid rows.
            # The conv bias is skipped: it is cancelled exactly by the mean.
            mask = m_ref[...]                                     # (1, M_out)
            mean = jnp.dot(mask, acc, preferred_element_type=jnp.float32) * inv_cnt
            cent = acc - mean
            var = jnp.dot(mask, cent * cent,
                          preferred_element_type=jnp.float32) * inv_cnt
            acc = cent * jax.lax.rsqrt(var + 1e-5) * g_ref[...] + bt_ref[...]
        else:
            acc = acc + b_ref[...]

        if act == "leaky":
            acc = jnp.where(acc >= 0.0, acc, 0.2 * acc)
        elif act == "sigmoid":
            acc = jax.nn.sigmoid(acc)
        o_ref[0] = acc.astype(out_dtype)

    in_specs = [pl.BlockSpec((1, M_in, c), lambda n: (n, 0, 0)) for c in cins]
    for (inp_idx, _, cout) in branches:
        in_specs.append(pl.BlockSpec((9, cins[inp_idx], cout), lambda n: (0, 0, 0)))
    if use_norm:
        in_specs += [pl.BlockSpec((1, cout_total), lambda n: (0, 0)),
                     pl.BlockSpec((1, cout_total), lambda n: (0, 0)),
                     pl.BlockSpec((1, M_out), lambda n: (0, 0))]
    else:
        in_specs.append(pl.BlockSpec((1, cout_total), lambda n: (0, 0)))

    return pl.pallas_call(
        kernel,
        out_shape=jax.ShapeDtypeStruct((N, M_out, cout_total), out_dtype),
        grid=(N,),
        in_specs=in_specs,
        out_specs=pl.BlockSpec((1, M_out, cout_total), lambda n: (n, 0, 0)),
        compiler_params=pltpu.CompilerParams(dimension_semantics=("parallel",)),
    )


def _fused_conv_apply(inputs, branch_params, use_norm, act, out_dtype=jnp.bfloat16):
    """inputs: list of NHWC arrays (same N, H, W).  branch_params: list of layer
    param dicts each with 'input_index', 'dilation', 'cout', 'w', 'b'/'gamma'/'beta'."""
    N, H, W, _ = inputs[0].shape
    D = max(bp["dilation"] for bp in branch_params)
    WpD, Hp = W + 2 * D, H + 2 * D
    M_out = _round_up(H * WpD, 8)
    M_in = _round_up(M_out + 2 * D * WpD + 2 * D, 8)

    x_flats, cins = [], []
    for x in inputs:
        cin = x.shape[-1]
        cins.append(cin)
        # reflect pad + flatten to rows (fused XLA producer chain under jit)
        xp = jnp.pad(x, ((0, 0), (D, D), (D, D), (0, 0)), mode="reflect")
        xf = xp.reshape(N, Hp * WpD, cin)
        xf = jnp.pad(xf, ((0, 0), (0, M_in - Hp * WpD), (0, 0)))
        x_flats.append(xf)

    branches = tuple((bp["input_index"], bp["dilation"], bp["cout"])
                     for bp in branch_params)
    cout_total = sum(bp["cout"] for bp in branch_params)

    fn = _fused_conv_call(N, H, W, D, tuple(cins), branches,
                          bool(use_norm), act, jnp.dtype(out_dtype).name)

    args = list(x_flats) + [bp["w"] for bp in branch_params]
    if use_norm:
        gamma = jnp.concatenate([bp["gamma"] for bp in branch_params], axis=-1)
        beta = jnp.concatenate([bp["beta"] for bp in branch_params], axis=-1)
        rid = jnp.arange(M_out, dtype=jnp.int32)
        mask = (((rid % WpD) < W) & (rid < H * WpD)).astype(jnp.float32)[None, :]
        args += [gamma, beta, mask]
    else:
        args.append(jnp.concatenate([bp["b"] for bp in branch_params], axis=-1))

    out = fn(*args)
    # drop wrapped (invalid) columns, restore NHWC
    return out[:, :H * WpD, :].reshape(N, H, WpD, cout_total)[:, :, :W, :]


# ----------------------------------------------------------------------------
# Layer wrappers (layout glue in JAX, hot path in Pallas)
# ----------------------------------------------------------------------------
def conv_layer_apply(p, x, out_dtype=jnp.bfloat16):
    bp = dict(p)
    bp["input_index"] = 0
    return _fused_conv_apply([x], [bp], p["instance_norm"], p["act"], out_dtype)


def maxpool2x2(x):
    # 2x2/2 max pool: single fused XLA reduce_window (zero-FLOP layout glue)
    return jax.lax.reduce_window(x, jnp.array(-jnp.inf, x.dtype), jax.lax.max,
                                 (1, 2, 2, 1), (1, 2, 2, 1), "VALID")


def upsample2x(x):
    # nn.Upsample(scale_factor=2, mode='nearest'); fuses into the pad/flatten
    # producer of the next conv kernel input.
    return jnp.repeat(jnp.repeat(x, 2, axis=1), 2, axis=2)


def upconv_apply(p, x):
    # UpsampleConvLayer: nearest 2x -> reflect-pad(1) -> 3x3 conv -> LeakyReLU
    return conv_layer_apply(p, upsample2x(x))


def upconv_pair_apply(pa, pb, x):
    # Two UpsampleConvLayers sharing the same input: one fused kernel call.
    xu = upsample2x(x)
    bpa, bpb = dict(pa), dict(pb)
    bpa["input_index"] = 0
    bpb["input_index"] = 0
    out = _fused_conv_apply([xu], [bpa, bpb], False, "leaky")
    ca = pa["cout"]
    return out[..., :ca], out[..., ca:]


def conv_multi_block_apply(p, x):
    keys = [("conv_3a", "conv_3b")]
    if p["max"] >= 5:
        keys.append(("conv_5a", "conv_5b"))
    if p["max"] >= 7:
        keys.append(("conv_7a", "conv_7b"))
    if p["max"] >= 9:
        keys.append(("conv_9a", "conv_9b"))
    use_norm = p["conv_3a"]["instance_norm"]

    # fused "a" stage: all branches share the same input block (read once)
    a_params = []
    for ka, _ in keys:
        bp = dict(p[ka])
        bp["input_index"] = 0
        a_params.append(bp)
    a_out = _fused_conv_apply([x], a_params, use_norm, "leaky")

    # fused "b" stage: branch i reads its own slice of the "a" output
    b_inputs, b_params, off = [], [], 0
    for i, (ka, kb) in enumerate(keys):
        c = p[ka]["cout"]
        b_inputs.append(a_out[..., off:off + c])
        off += c
        bp = dict(p[kb])
        bp["input_index"] = i
        b_params.append(bp)
    # output layout is already the PyTorch channel-concat order [3,5,7,9]
    return _fused_conv_apply(b_inputs, b_params, use_norm, "leaky")


# ----------------------------------------------------------------------------
# Deterministic parameter initialization (synthetic, matches PyTorch shapes)
# ----------------------------------------------------------------------------
def init_conv_layer(key, cin, cout, kernel_size, relu=True, instance_norm=False,
                    sigmoid=False):
    d = max(kernel_size // 2, 1)            # reflect pad = conv dilation = k//2
    k1, k2 = jax.random.split(key)
    fan_in = cin * 9
    bound = 1.0 / (fan_in ** 0.5)
    w = jax.random.uniform(k1, (3, 3, cin, cout), jnp.float32, -bound, bound)
    b = jax.random.uniform(k2, (cout,), jnp.float32, -bound, bound)
    act = "leaky" if relu else ("sigmoid" if sigmoid else "none")
    return dict(
        w=w.reshape(9, cin, cout).astype(jnp.bfloat16),     # bf16 MXU path
        b=b.reshape(1, cout),
        gamma=jnp.ones((1, cout), jnp.float32),              # IN(affine=True) init
        beta=jnp.zeros((1, cout), jnp.float32),
        dilation=d, cout=cout,
        instance_norm=bool(instance_norm),
        act=act,
    )


def init_cmb(key, cin, cout, max_conv, instance_norm):
    ks = jax.random.split(key, 8)
    p = {"max": max_conv}
    p["conv_3a"] = init_conv_layer(ks[0], cin, cout, 3, True, instance_norm)
    p["conv_3b"] = init_conv_layer(ks[1], cout, cout, 3, True, instance_norm)
    if max_conv >= 5:
        p["conv_5a"] = init_conv_layer(ks[2], cin, cout, 5, True, instance_norm)
        p["conv_5b"] = init_conv_layer(ks[3], cout, cout, 5, True, instance_norm)
    if max_conv >= 7:
        p["conv_7a"] = init_conv_layer(ks[4], cin, cout, 7, True, instance_norm)
        p["conv_7b"] = init_conv_layer(ks[5], cout, cout, 7, True, instance_norm)
    if max_conv >= 9:
        p["conv_9a"] = init_conv_layer(ks[6], cin, cout, 9, True, instance_norm)
        p["conv_9b"] = init_conv_layer(ks[7], cout, cout, 9, True, instance_norm)
    return p


def init_upconv(key, cin, cout):
    return init_conv_layer(key, cin, cout, 3, relu=True, instance_norm=False)


def init_pynet(key, level, channel=8, instance_norm=True, instance_norm_level_1=False):
    ks = iter(jax.random.split(key, 64))
    c = channel
    P = {"level": level}
    P["conv_l1_d1"] = init_cmb(next(ks), 4, c, 3, False)
    P["conv_l2_d1"] = init_cmb(next(ks), c, c * 2, 3, instance_norm)
    P["conv_l3_d1"] = init_cmb(next(ks), c * 2, c * 4, 3, instance_norm)
    P["conv_l4_d1"] = init_cmb(next(ks), c * 4, c * 8, 3, instance_norm)
    P["conv_l5_d1"] = init_cmb(next(ks), c * 8, c * 16, 3, instance_norm)
    P["conv_l5_d4"] = init_cmb(next(ks), c * 16, c * 16, 3, instance_norm)
    P["conv_t4a"] = init_upconv(next(ks), c * 16, c * 8)
    P["conv_t4b"] = init_upconv(next(ks), c * 16, c * 8)
    P["conv_l5_out"] = init_conv_layer(next(ks), c * 16, 3, 3, relu=False, sigmoid=True)
    P["conv_l4_d3"] = init_cmb(next(ks), c * 16, c * 8, 3, instance_norm)
    P["conv_l4_d4"] = init_cmb(next(ks), c * 8, c * 8, 3, instance_norm)
    P["conv_l4_d6"] = init_cmb(next(ks), c * 16, c * 8, 3, instance_norm)
    P["conv_t3a"] = init_upconv(next(ks), c * 8, c * 4)
    P["conv_t3b"] = init_upconv(next(ks), c * 8, c * 4)
    P["conv_l4_out"] = init_conv_layer(next(ks), c * 8, 3, 3, relu=False, sigmoid=True)
    P["conv_l3_d3"] = init_cmb(next(ks), c * 8, c * 4, 5, instance_norm)
    P["conv_l3_d4"] = init_cmb(next(ks), c * 8, c * 4, 5, instance_norm)
    P["conv_l3_d6"] = init_cmb(next(ks), c * 16, c * 4, 3, instance_norm)
    P["conv_t2a"] = init_upconv(next(ks), c * 4, c * 2)
    P["conv_t2b"] = init_upconv(next(ks), c * 4, c * 2)
    P["conv_l3_out"] = init_conv_layer(next(ks), c * 4, 3, 3, relu=False, sigmoid=True)
    P["conv_l2_d3"] = init_cmb(next(ks), c * 4, c * 2, 5, instance_norm)
    P["conv_l2_d5"] = init_cmb(next(ks), c * 6, c * 2, 7, instance_norm)
    P["conv_l2_d6"] = init_cmb(next(ks), c * 6, c * 2, 7, instance_norm)
    P["conv_l2_d8"] = init_cmb(next(ks), c * 8, c * 2, 5, instance_norm)
    P["conv_l2_d10"] = init_cmb(next(ks), c * 6, c * 2, 3, instance_norm)
    P["conv_t1a"] = init_upconv(next(ks), c * 2, c)
    P["conv_t1b"] = init_upconv(next(ks), c * 2, c)
    P["conv_l2_out"] = init_conv_layer(next(ks), c * 2, 3, 3, relu=False, sigmoid=True)
    P["conv_l1_d3"] = init_cmb(next(ks), c * 2, c, 5, False)
    P["conv_l1_d5"] = init_cmb(next(ks), c * 3, c, 7, instance_norm_level_1)
    P["conv_l1_d6"] = init_cmb(next(ks), c * 3, c, 9, instance_norm_level_1)
    P["conv_l1_d7"] = init_cmb(next(ks), c * 4, c, 9, instance_norm_level_1)
    P["conv_l1_d8"] = init_cmb(next(ks), c * 4, c, 7, instance_norm_level_1)
    P["conv_l1_d10"] = init_cmb(next(ks), c * 4, c, 5, instance_norm_level_1)
    P["conv_l1_d12"] = init_cmb(next(ks), c * 4, c, 3, False)
    P["conv_l1_out"] = init_conv_layer(next(ks), c, 3, 3, relu=False, sigmoid=True)
    P["conv_t0"] = init_upconv(next(ks), c, 16)
    P["conv_l0_d1"] = init_conv_layer(next(ks), 16, 3, 3, relu=False, sigmoid=True)
    return P


# ----------------------------------------------------------------------------
# Full forward pass (mirrors PyNET_smaller.forward)
# ----------------------------------------------------------------------------
def pynet_forward(P, x_nchw):
    level = P["level"]
    # NCHW -> NHWC; inter-layer activations kept in bf16 (halves HBM traffic)
    x = jnp.transpose(x_nchw, (0, 2, 3, 1)).astype(jnp.bfloat16)

    conv_l1_d1 = conv_multi_block_apply(P["conv_l1_d1"], x)
    pool1 = maxpool2x2(conv_l1_d1)
    conv_l2_d1 = conv_multi_block_apply(P["conv_l2_d1"], pool1)
    pool2 = maxpool2x2(conv_l2_d1)
    conv_l3_d1 = conv_multi_block_apply(P["conv_l3_d1"], pool2)
    pool3 = maxpool2x2(conv_l3_d1)
    conv_l4_d1 = conv_multi_block_apply(P["conv_l4_d1"], pool3)
    pool4 = maxpool2x2(conv_l4_d1)

    # ---- level 5 ----
    c5d1 = conv_multi_block_apply(P["conv_l5_d1"], pool4)
    c5d2 = conv_multi_block_apply(P["conv_l5_d4"], c5d1)
    conv_t4a, conv_t4b = upconv_pair_apply(P["conv_t4a"], P["conv_t4b"], c5d2)
    output_l5 = conv_layer_apply(P["conv_l5_out"], c5d2, out_dtype=jnp.float32)
    enhanced = output_l5

    if level < 5:
        d2 = jnp.concatenate([conv_l4_d1, conv_t4a], axis=-1)
        d3 = conv_multi_block_apply(P["conv_l4_d3"], d2)
        d4 = conv_multi_block_apply(P["conv_l4_d4"], d3)
        d5 = jnp.concatenate([d4, conv_t4b], axis=-1)
        d6 = conv_multi_block_apply(P["conv_l4_d6"], d5)
        conv_t3a, conv_t3b = upconv_pair_apply(P["conv_t3a"], P["conv_t3b"], d6)
        output_l4 = conv_layer_apply(P["conv_l4_out"], d6, out_dtype=jnp.float32)

    if level < 4:
        d2 = jnp.concatenate([conv_l3_d1, conv_t3a], axis=-1)
        d3 = conv_multi_block_apply(P["conv_l3_d3"], d2) + d2
        d4 = conv_multi_block_apply(P["conv_l3_d4"], d3)
        d5 = jnp.concatenate([d4, conv_l3_d1, conv_t3b], axis=-1)
        d6 = conv_multi_block_apply(P["conv_l3_d6"], d5)
        conv_t2a, conv_t2b = upconv_pair_apply(P["conv_t2a"], P["conv_t2b"], d6)
        output_l3 = conv_layer_apply(P["conv_l3_out"], d6, out_dtype=jnp.float32)

    if level < 3:
        d2 = jnp.concatenate([conv_l2_d1, conv_t2a], axis=-1)
        d3 = conv_multi_block_apply(P["conv_l2_d3"], d2)
        d4 = jnp.concatenate([d3, conv_l2_d1], axis=-1)
        d5 = conv_multi_block_apply(P["conv_l2_d5"], d4) + d4
        d6 = conv_multi_block_apply(P["conv_l2_d6"], d5)
        d7 = jnp.concatenate([d6, conv_l2_d1], axis=-1)
        d8 = conv_multi_block_apply(P["conv_l2_d8"], d7)
        d9 = jnp.concatenate([d8, conv_t2b], axis=-1)
        d10 = conv_multi_block_apply(P["conv_l2_d10"], d9)
        conv_t1a, conv_t1b = upconv_pair_apply(P["conv_t1a"], P["conv_t1b"], d10)
        output_l2 = conv_layer_apply(P["conv_l2_out"], d10, out_dtype=jnp.float32)

    if level < 2:
        d2 = jnp.concatenate([conv_l1_d1, conv_t1a], axis=-1)
        d3 = conv_multi_block_apply(P["conv_l1_d3"], d2)
        d4 = jnp.concatenate([d3, conv_l1_d1], axis=-1)
        d5 = conv_multi_block_apply(P["conv_l1_d5"], d4)
        d6 = conv_multi_block_apply(P["conv_l1_d6"], d5)
        d7 = conv_multi_block_apply(P["conv_l1_d7"], d6) + d6
        d8 = conv_multi_block_apply(P["conv_l1_d8"], d7)
        d9 = jnp.concatenate([d8, conv_l1_d1], axis=-1)
        d10 = conv_multi_block_apply(P["conv_l1_d10"], d9)
        d11 = jnp.concatenate([d10, conv_t1b, conv_l1_d1], axis=-1)
        d12 = conv_multi_block_apply(P["conv_l1_d12"], d11)
        conv_t0 = upconv_apply(P["conv_t0"], d12)
        output_l1 = conv_layer_apply(P["conv_l1_out"], d12, out_dtype=jnp.float32)

    if level < 1:
        output_l0 = conv_layer_apply(P["conv_l0_d1"], conv_t0, out_dtype=jnp.float32)

    if level == 0:
        enhanced = output_l0
    elif level == 1:
        enhanced = output_l1
    elif level == 2:
        enhanced = output_l2
    elif level == 3:
        enhanced = output_l3
    elif level == 4:
        enhanced = output_l4
    # level == 5 -> output_l5 (already set)

    return jnp.transpose(enhanced, (0, 3, 1, 2)).astype(jnp.float32)  # NHWC -> NCHW


# ----------------------------------------------------------------------------
# Pure-JAX reference for a single ConvLayer (for kernel sanity checks)
# ----------------------------------------------------------------------------
def _ref_convlayer(p, x):
    d = p["dilation"]
    w = p["w"].astype(jnp.float32).reshape(3, 3, x.shape[-1], p["cout"])
    xp = jnp.pad(x, ((0, 0), (d, d), (d, d), (0, 0)), mode="reflect")
    y = jax.lax.conv_general_dilated(
        xp, w, (1, 1), "VALID", rhs_dilation=(d, d),
        dimension_numbers=("NHWC", "HWIO", "NHWC")) + p["b"].reshape(1, 1, 1, -1)
    if p["act"] == "leaky":
        y = jnp.where(y >= 0.0, y, 0.2 * y)
    elif p["act"] == "sigmoid":
        y = jax.nn.sigmoid(y)
    return y


# ----------------------------------------------------------------------------
if __name__ == "__main__":
    key = jax.random.PRNGKey(0)
    pkey, xkey, ckey = jax.random.split(key, 3)

    # 4 pooling levels need H, W divisible by 16 and spatial >= 2 at level 5
    # for the reflection pad, so use 32x32.
    N, CIN, H, W = 2, 4, 32, 32
    level = 0            # run the full pyramid
    channel = 8

    params = init_pynet(pkey, level=level, channel=channel,
                        instance_norm=True, instance_norm_level_1=False)
    x = jax.random.uniform(xkey, (N, CIN, H, W), jnp.float32)

    # --- check 1: single fused ConvLayer vs XLA reference ---
    chk_p = init_conv_layer(ckey, 4, 8, 5, relu=True, instance_norm=False)
    chk_x = jax.random.uniform(jax.random.fold_in(ckey, 1), (1, 16, 16, 4),
                               jnp.float32)
    got = conv_layer_apply(chk_p, chk_x, out_dtype=jnp.float32)
    ref = _ref_convlayer(chk_p, chk_x)
    assert float(jnp.max(jnp.abs(got - ref))) < 5e-2, "conv kernel mismatch"

    # --- check 2: fused multi-dilation branches (k=3,5,7) sharing one input ---
    chk_ps = [init_conv_layer(jax.random.fold_in(ckey, 10 + i), 4, 8, k)
              for i, k in enumerate((3, 5, 7))]
    chk_x2 = jax.random.uniform(jax.random.fold_in(ckey, 20), (1, 12, 12, 4),
                                jnp.float32)
    bps = []
    for cp in chk_ps:
        bp = dict(cp)
        bp["input_index"] = 0
        bps.append(bp)
    fused = _fused_conv_apply([chk_x2], bps, False, "leaky", jnp.float32)
    for i, cp in enumerate(chk_ps):
        ref_i = _ref_convlayer(cp, chk_x2)
        got_i = fused[..., i * 8:(i + 1) * 8]
        assert float(jnp.max(jnp.abs(got_i - ref_i))) < 5e-2, \
            f"fused multi-dilation mismatch (branch {i})"

    fwd = jax.jit(lambda inp: pynet_forward(params, inp))
    out = jax.block_until_ready(fwd(x))

    assert out.shape == (N, 3, 2 * H, 2 * W), out.shape   # level-0 output is 2x upsampled
    assert bool(jnp.all(jnp.isfinite(out)))
    print("KERNEL_OK")
</pallas_src>

<mosaic_0001>
module attributes {stable_mosaic.version = 11 : i64} {
  func.func @kernel(%arg0: i32, %arg1: memref<1x408x4xf32, #tpu.memory_space<vmem>>, %arg2: memref<9x4x8xbf16, #tpu.memory_space<vmem>>, %arg3: memref<1x8xf32, #tpu.memory_space<vmem>>, %arg4: memref<1x320x8xf32, #tpu.memory_space<vmem>>) attributes {dimension_semantics = [#tpu.dimension_semantics<parallel>], iteration_bounds = array<i64: 1>, scalar_prefetch = 0 : i64, scratch_operands = 0 : i64, tpu.core_type = #tpu.core_type<tc>, window_params = [{transform_indices = @transform_0, window_bounds = array<i64: 1, 408, 4>}, {pipeline_mode = #tpu.pipeline_mode<synchronous>, transform_indices = @transform_1, window_bounds = array<i64: 9, 4, 8>}, {pipeline_mode = #tpu.pipeline_mode<synchronous>, transform_indices = @transform_2, window_bounds = array<i64: 1, 8>}, {transform_indices = @transform_3, window_bounds = array<i64: 1, 320, 8>}]} {
    %c0 = arith.constant 0 : index
    %c0_0 = arith.constant 0 : index
    %c0_1 = arith.constant 0 : index
    %0 = vector.load %arg1[%c0, %c0_0, %c0_1] : memref<1x408x4xf32, #tpu.memory_space<vmem>>, vector<1x320x4xf32>
    %1 = vector.shape_cast %0 : vector<1x320x4xf32> to vector<320x4xf32>
    %2 = arith.truncf %1 : vector<320x4xf32> to vector<320x4xbf16>
    %c0_2 = arith.constant 0 : index
    %c0_3 = arith.constant 0 : index
    %c0_4 = arith.constant 0 : index
    %3 = vector.load %arg2[%c0_2, %c0_3, %c0_4] : memref<9x4x8xbf16, #tpu.memory_space<vmem>>, vector<1x4x8xbf16>
    %4 = vector.shape_cast %3 : vector<1x4x8xbf16> to vector<4x8xbf16>
    %cst = arith.constant dense<0.000000e+00> : vector<320x8xf32>
    %5 = tpu.matmul %2, %4, %cst {dimension_numbers = #tpu.dot_dimension_numbers<[1], [0], [0], [1], [0, 0, 1, 1], [], []>} : vector<320x4xbf16>, vector<4x8xbf16>, vector<320x8xf32> -> vector<320x8xf32>
    %c0_5 = arith.constant 0 : index
    %c2 = arith.constant 2 : index
    %c0_6 = arith.constant 0 : index
    %6 = vector.load %arg1[%c0_5, %c2, %c0_6] : memref<1x408x4xf32, #tpu.memory_space<vmem>>, vector<1x320x4xf32>
    %7 = vector.shape_cast %6 : vector<1x320x4xf32> to vector<320x4xf32>
    %8 = arith.truncf %7 : vector<320x4xf32> to vector<320x4xbf16>
    %c1 = arith.constant 1 : index
    %c0_7 = arith.constant 0 : index
    %c0_8 = arith.constant 0 : index
    %9 = vector.load %arg2[%c1, %c0_7, %c0_8] : memref<9x4x8xbf16, #tpu.memory_space<vmem>>, vector<1x4x8xbf16>
    %10 = vector.shape_cast %9 : vector<1x4x8xbf16> to vector<4x8xbf16>
    %cst_9 = arith.constant dense<0.000000e+00> : vector<320x8xf32>
    %11 = tpu.matmul %8, %10, %cst_9 {dimension_numbers = #tpu.dot_dimension_numbers<[1], [0], [0], [1], [0, 0, 1, 1], [], []>} : vector<320x4xbf16>, vector<4x8xbf16>, vector<320x8xf32> -> vector<320x8xf32>
    %12 = arith.addf %5, %11 : vector<320x8xf32>
    %c0_10 = arith.constant 0 : index
    %c4 = arith.constant 4 : index
    %c0_11 = arith.constant 0 : index
    %13 = vector.load %arg1[%c0_10, %c4, %c0_11] : memref<1x408x4xf32, #tpu.memory_space<vmem>>, vector<1x320x4xf32>
    %14 = vector.shape_cast %13 : vector<1x320x4xf32> to vector<320x4xf32>
    %15 = arith.truncf %14 : vector<320x4xf32> to vector<320x4xbf16>
    %c2_12 = arith.constant 2 : index
    %c0_13 = arith.constant 0 : index
    %c0_14 = arith.constant 0 : index
    %16 = vector.load %arg2[%c2_12, %c0_13, %c0_14] : memref<9x4x8xbf16, #tpu.memory_space<vmem>>, vector<1x4x8xbf16>
    %17 = vector.shape_cast %16 : vector<1x4x8xbf16> to vector<4x8xbf16>
    %cst_15 = arith.constant dense<0.000000e+00> : vector<320x8xf32>
    %18 = tpu.matmul %15, %17, %cst_15 {dimension_numbers = #tpu.dot_dimension_numbers<[1], [0], [0], [1], [0, 0, 1, 1], [], []>} : vector<320x4xbf16>, vector<4x8xbf16>, vector<320x8xf32> -> vector<320x8xf32>
    %19 = arith.addf %12, %18 : vector<320x8xf32>
    %c0_16 = arith.constant 0 : index
    %c40 = arith.constant 40 : index
    %c0_17 = arith.constant 0 : index
    %20 = vector.load %arg1[%c0_16, %c40, %c0_17] : memref<1x408x4xf32, #tpu.memory_space<vmem>>, vector<1x320x4xf32>
    %21 = vector.shape_cast %20 : vector<1x320x4xf32> to vector<320x4xf32>
    %22 = arith.truncf %21 : vector<320x4xf32> to vector<320x4xbf16>
    %c3 = arith.constant 3 : index
    %c0_18 = arith.constant 0 : index
    %c0_19 = arith.constant 0 : index
    %23 = vector.load %arg2[%c3, %c0_18, %c0_19] : memref<9x4x8xbf16, #tpu.memory_space<vmem>>, vector<1x4x8xbf16>
    %24 = vector.shape_cast %23 : vector<1x4x8xbf16> to vector<4x8xbf16>
    %cst_20 = arith.constant dense<0.000000e+00> : vector<320x8xf32>
    %25 = tpu.matmul %22, %24, %cst_20 {dimension_numbers = #tpu.dot_dimension_numbers<[1], [0], [0], [1], [0, 0, 1, 1], [], []>} : vector<320x4xbf16>, vector<4x8xbf16>, vector<320x8xf32> -> vector<320x8xf32>
    %26 = arith.addf %19, %25 : vector<320x8xf32>
    %c0_21 = arith.constant 0 : index
    %c42 = arith.constant 42 : index
    %c0_22 = arith.constant 0 : index
    %27 = vector.load %arg1[%c0_21, %c42, %c0_22] : memref<1x408x4xf32, #tpu.memory_space<vmem>>, vector<1x320x4xf32>
    %28 = vector.shape_cast %27 : vector<1x320x4xf32> to vector<320x4xf32>
    %29 = arith.truncf %28 : vector<320x4xf32> to vector<320x4xbf16>
    %c4_23 = arith.constant 4 : index
    %c0_24 = arith.constant 0 : index
    %c0_25 = arith.constant 0 : index
    %30 = vector.load %arg2[%c4_23, %c0_24, %c0_25] : memref<9x4x8xbf16, #tpu.memory_space<vmem>>, vector<1x4x8xbf16>
    %31 = vector.shape_cast %30 : vector<1x4x8xbf16> to vector<4x8xbf16>
    %cst_26 = arith.constant dense<0.000000e+00> : vector<320x8xf32>
    %32 = tpu.matmul %29, %31, %cst_26 {dimension_numbers = #tpu.dot_dimension_numbers<[1], [0], [0], [1], [0, 0, 1, 1], [], []>} : vector<320x4xbf16>, vector<4x8xbf16>, vector<320x8xf32> -> vector<320x8xf32>
    %33 = arith.addf %26, %32 : vector<320x8xf32>
    %c0_27 = arith.constant 0 : index
    %c44 = arith.constant 44 : index
    %c0_28 = arith.constant 0 : index
    %34 = vector.load %arg1[%c0_27, %c44, %c0_28] : memref<1x408x4xf32, #tpu.memory_space<vmem>>, vector<1x320x4xf32>
    %35 = vector.shape_cast %34 : vector<1x320x4xf32> to vector<320x4xf32>
    %36 = arith.truncf %35 : vector<320x4xf32> to vector<320x4xbf16>
    %c5 = arith.constant 5 : index
    %c0_29 = arith.constant 0 : index
    %c0_30 = arith.constant 0 : index
    %37 = vector.load %arg2[%c5, %c0_29, %c0_30] : memref<9x4x8xbf16, #tpu.memory_space<vmem>>, vector<1x4x8xbf16>
    %38 = vector.shape_cast %37 : vector<1x4x8xbf16> to vector<4x8xbf16>
    %cst_31 = arith.constant dense<0.000000e+00> : vector<320x8xf32>
    %39 = tpu.matmul %36, %38, %cst_31 {dimension_numbers = #tpu.dot_dimension_numbers<[1], [0], [0], [1], [0, 0, 1, 1], [], []>} : vector<320x4xbf16>, vector<4x8xbf16>, vector<320x8xf32> -> vector<320x8xf32>
    %40 = arith.addf %33, %39 : vector<320x8xf32>
    %c0_32 = arith.constant 0 : index
    %c80 = arith.constant 80 : index
    %c0_33 = arith.constant 0 : index
    %41 = vector.load %arg1[%c0_32, %c80, %c0_33] : memref<1x408x4xf32, #tpu.memory_space<vmem>>, vector<1x320x4xf32>
    %42 = vector.shape_cast %41 : vector<1x320x4xf32> to vector<320x4xf32>
    %43 = arith.truncf %42 : vector<320x4xf32> to vector<320x4xbf16>
    %c6 = arith.constant 6 : index
    %c0_34 = arith.constant 0 : index
    %c0_35 = arith.constant 0 : index
    %44 = vector.load %arg2[%c6, %c0_34, %c0_35] : memref<9x4x8xbf16, #tpu.memory_space<vmem>>, vector<1x4x8xbf16>
    %45 = vector.shape_cast %44 : vector<1x4x8xbf16> to vector<4x8xbf16>
    %cst_36 = arith.constant dense<0.000000e+00> : vector<320x8xf32>
    %46 = tpu.matmul %43, %45, %cst_36 {dimension_numbers = #tpu.dot_dimension_numbers<[1], [0], [0], [1], [0, 0, 1, 1], [], []>} : vector<320x4xbf16>, vector<4x8xbf16>, vector<320x8xf32> -> vector<320x8xf32>
    %47 = arith.addf %40, %46 : vector<320x8xf32>
    %c0_37 = arith.constant 0 : index
    %c82 = arith.constant 82 : index
    %c0_38 = arith.constant 0 : index
    %48 = vector.load %arg1[%c0_37, %c82, %c0_38] : memref<1x408x4xf32, #tpu.memory_space<vmem>>, vector<1x320x4xf32>
    %49 = vector.shape_cast %48 : vector<1x320x4xf32> to vector<320x4xf32>
    %50 = arith.truncf %49 : vector<320x4xf32> to vector<320x4xbf16>
    %c7 = arith.constant 7 : index
    %c0_39 = arith.constant 0 : index
    %c0_40 = arith.constant 0 : index
    %51 = vector.load %arg2[%c7, %c0_39, %c0_40] : memref<9x4x8xbf16, #tpu.memory_space<vmem>>, vector<1x4x8xbf16>
    %52 = vector.shape_cast %51 : vector<1x4x8xbf16> to vector<4x8xbf16>
    %cst_41 = arith.constant dense<0.000000e+00> : vector<320x8xf32>
    %53 = tpu.matmul %50, %52, %cst_41 {dimension_numbers = #tpu.dot_dimension_numbers<[1], [0], [0], [1], [0, 0, 1, 1], [], []>} : vector<320x4xbf16>, vector<4x8xbf16>, vector<320x8xf32> -> vector<320x8xf32>
    %54 = arith.addf %47, %53 : vector<320x8xf32>
    %c0_42 = arith.constant 0 : index
    %c84 = arith.constant 84 : index
    %c0_43 = arith.constant 0 : index
    %55 = vector.load %arg1[%c0_42, %c84, %c0_43] : memref<1x408x4xf32, #tpu.memory_space<vmem>>, vector<1x320x4xf32>
    %56 = vector.shape_cast %55 : vector<1x320x4xf32> to vector<320x4xf32>
    %57 = arith.truncf %56 : vector<320x4xf32> to vector<320x4xbf16>
    %c8 = arith.constant 8 : index
    %c0_44 = arith.constant 0 : index
    %c0_45 = arith.constant 0 : index
    %58 = vector.load %arg2[%c8, %c0_44, %c0_45] : memref<9x4x8xbf16, #tpu.memory_space<vmem>>, vector<1x4x8xbf16>
    %59 = vector.shape_cast %58 : vector<1x4x8xbf16> to vector<4x8xbf16>
    %cst_46 = arith.constant dense<0.000000e+00> : vector<320x8xf32>
    %60 = tpu.matmul %57, %59, %cst_46 {dimension_numbers = #tpu.dot_dimension_numbers<[1], [0], [0], [1], [0, 0, 1, 1], [], []>} : vector<320x4xbf16>, vector<4x8xbf16>, vector<320x8xf32> -> vector<320x8xf32>
    %61 = arith.addf %54, %60 : vector<320x8xf32>
    %c0_47 = arith.constant 0 : index
    %c0_48 = arith.constant 0 : index
    %62 = vector.load %arg3[%c0_47, %c0_48] : memref<1x8xf32, #tpu.memory_space<vmem>>, vector<1x8xf32>
    %63 = vector.broadcast %62 : vector<1x8xf32> to vector<320x8xf32>
    %64 = arith.addf %61, %63 : vector<320x8xf32>
    %cst_49 = arith.constant 0.000000e+00 : f32
    %65 = vector.broadcast %cst_49 : f32 to vector<320x8xf32>
    %66 = arith.cmpf oge, %64, %65 : vector<320x8xf32>
    %cst_50 = arith.constant 2.000000e-01 : f32
    %67 = vector.broadcast %cst_50 : f32 to vector<320x8xf32>
    %68 = arith.mulf %67, %64 : vector<320x8xf32>
    %69 = arith.select %66, %64, %68 : vector<320x8xi1>, vector<320x8xf32>
    %c0_51 = arith.constant 0 : index
    %c0_52 = arith.constant 0 : index
    %c0_53 = arith.constant 0 : index
    %70 = vector.load %arg4[%c0_51, %c0_52, %c0_53] : memref<1x320x8xf32, #tpu.memory_space<vmem>>, vector<1x320x8xf32>
    %71 = vector.shape_cast %70 : vector<1x320x8xf32> to vector<320x8xf32>
    %72 = vector.shape_cast %69 : vector<320x8xf32> to vector<1x320x8xf32>
    tpu.vector_store %arg4[%c0_51, %c0_52, %c0_53], %72 {strides = array<i32>} : memref<1x320x8xf32, #tpu.memory_space<vmem>>, vector<1x320x8xf32>,
    return
  }
  func.func @transform_0(%arg0: i32) -> (i32, i32, i32) {
    %c0_i32 = arith.constant 0 : i32
    %c0_i32_0 = arith.constant 0 : i32
    %c0_i32_1 = arith.constant 0 : i32
    return %arg0, %c0_i32, %c0_i32_0 : i32, i32, i32
  }
  func.func @transform_1(%arg0: i32) -> (i32, i32, i32) {
    %c0_i32 = arith.constant 0 : i32
    %c0_i32_0 = arith.constant 0 : i32
    %c0_i32_1 = arith.constant 0 : i32
    %c0_i32_2 = arith.constant 0 : i32
    return %c0_i32, %c0_i32_0, %c0_i32_1 : i32, i32, i32
  }
  func.func @transform_2(%arg0: i32) -> (i32, i32) {
    %c0_i32 = arith.constant 0 : i32
    %c0_i32_0 = arith.constant 0 : i32
    %c0_i32_1 = arith.constant 0 : i32
    return %c0_i32, %c0_i32_0 : i32, i32
  }
  func.func @transform_3(%arg0: i32) -> (i32, i32, i32) {
    %c0_i32 = arith.constant 0 : i32
    %c0_i32_0 = arith.constant 0 : i32
    %c0_i32_1 = arith.constant 0 : i32
    return %arg0, %c0_i32, %c0_i32_0 : i32, i32, i32
  }
}

</mosaic_0001>

<llo_original>
// kernel: tpu_custom_call.1
$region0: #{tpu_custom_call.1}
  #allocation0 [shape = 'u32[]', space=smem, size = 0x4, offset = 0x4, fixed_abs, tag = 'smem constant byte address 0x4 - core index']
  #allocation1 [shape = 'u32[72,128]{1,0:T(1,128)}', space=vmem, size = 0x9000, scoped, tag = 'internal scratch']
  %s0 = inlined_call_operand.vmem [shape: f32[1,408,4], index: 0, kind: input, shape index: {}]
  %s1 = inlined_call_operand.vmem [shape: bf16[9,4,8], index: 1, kind: input, shape index: {}]
  %s2 = inlined_call_operand.vmem [shape: f32[1,8], index: 2, kind: input, shape index: {}]
  %s3 = inlined_call_operand.vmem [shape: f32[1,320,8], index: 3, kind: output, shape index: {}]
  %s4 = sld [smem:[#allocation0]]
  $region22: #{tpu_custom_call.1} parent=0
    _
  %s6 = ssub.s32 1, %s4
  %s7 = scalar_select 0, %s6, %s4
  // Predicated region
  $region2: #{tpu_custom_call.1} parent=0 // pred_check
    _
  $region3: #{tpu_custom_call.1} parent=0 // pred_check_branch
    %9 = sbr.rel (0) target = $region5
  $region4: #{tpu_custom_call.1} parent=0 // pred_region
    _
  $region5: #{tpu_custom_call.1} parent=0 // pred_fallthru
    _
  // Predicated region
  $region6: #{tpu_custom_call.1} parent=0 // pred_check
    _
  $region7: #{tpu_custom_call.1} parent=0 // pred_check_branch
    %11 = sbr.rel (0) target = $region9
  $region8: #{tpu_custom_call.1} parent=0 // pred_region
    _
  $region9: #{tpu_custom_call.1} parent=0 // pred_fallthru
    _
  // Predicated region
  $region10: #{tpu_custom_call.1} parent=0 // pred_check
    _
  $region11: #{tpu_custom_call.1} parent=0 // pred_check_branch
    %13 = sbr.rel (0) target = $region13
  $region12: #{tpu_custom_call.1} parent=0 // pred_region
    _
  $region13: #{tpu_custom_call.1} parent=0 // pred_fallthru
    _
  %v15 = vld [vmem:[%s0] sm:$0xff]
  %v16 = vld [vmem:[%s0 + $0x8] sm:$0xff]
  %v17 = vld [vmem:[%s0 + $0x10] sm:$0xff]
  %v18 = vld [vmem:[%s0 + $0x18] sm:$0xff]
  %v19 = vld [vmem:[%s0 + $0x20] sm:$0xff]
  %v20 = vld [vmem:[%s0 + $0x28] sm:$0xff]
  %v21 = vld [vmem:[%s0 + $0x30] sm:$0xff]
  %v22 = vld [vmem:[%s0 + $0x38] sm:$0xff]
  %v23 = vld [vmem:[%s0 + $0x40] sm:$0xff]
  %v24 = vld [vmem:[%s0 + $0x48] sm:$0xff]
  %v25 = vld [vmem:[%s0 + $0x50] sm:$0xff]
  %v26 = vld [vmem:[%s0 + $0x58] sm:$0xff]
  %v27 = vld [vmem:[%s0 + $0x60] sm:$0xff]
  %v28 = vld [vmem:[%s0 + $0x68] sm:$0xff]
  %v29 = vld [vmem:[%s0 + $0x70] sm:$0xff]
  %v30 = vld [vmem:[%s0 + $0x78] sm:$0xff]
  %v31 = vld [vmem:[%s0 + $0x80] sm:$0xff]
  %v32 = vld [vmem:[%s0 + $0x88] sm:$0xff]
  %v33 = vld [vmem:[%s0 + $0x90] sm:$0xff]
  %v34 = vld [vmem:[%s0 + $0x98] sm:$0xff]
  %v35 = vld [vmem:[%s0 + $0xa0] sm:$0xff]
  %v36 = vld [vmem:[%s0 + $0xa8] sm:$0xff]
  %v37 = vld [vmem:[%s0 + $0xb0] sm:$0xff]
  %v38 = vld [vmem:[%s0 + $0xb8] sm:$0xff]
  %v39 = vld [vmem:[%s0 + $0xc0] sm:$0xff]
  %v40 = vld [vmem:[%s0 + $0xc8] sm:$0xff]
  %v41 = vld [vmem:[%s0 + $0xd0] sm:$0xff]
  %v42 = vld [vmem:[%s0 + $0xd8] sm:$0xff]
  %v43 = vld [vmem:[%s0 + $0xe0] sm:$0xff]
  %v44 = vld [vmem:[%s0 + $0xe8] sm:$0xff]
  %v45 = vld [vmem:[%s0 + $0xf0] sm:$0xff]
  %v46 = vld [vmem:[%s0 + $0xf8] sm:$0xff]
  %v47 = vld [vmem:[%s0 + $0x100] sm:$0xff]
  %v48 = vld [vmem:[%s0 + $0x108] sm:$0xff]
  %v49 = vld [vmem:[%s0 + $0x110] sm:$0xff]
  %v50 = vld [vmem:[%s0 + $0x118] sm:$0xff]
  %v51 = vld [vmem:[%s0 + $0x120] sm:$0xff]
  %v52 = vld [vmem:[%s0 + $0x128] sm:$0xff]
  %v53 = vld [vmem:[%s0 + $0x130] sm:$0xff]
  %v54 = vld [vmem:[%s0 + $0x138] sm:$0xff]
  %v55 = vpack.c.bf16 %v16, %v15
  %v56 = vpack.c.bf16 %v18, %v17
  %v57 = vpack.c.bf16 %v20, %v19
  %v58 = vpack.c.bf16 %v22, %v21
  %v59 = vpack.c.bf16 %v24, %v23
  %v60 = vpack.c.bf16 %v26, %v25
  %v61 = vpack.c.bf16 %v28, %v27
  %v62 = vpack.c.bf16 %v30, %v29
  %v63 = vpack.c.bf16 %v32, %v31
  %v64 = vpack.c.bf16 %v34, %v33
  %v65 = vpack.c.bf16 %v36, %v35
  %v66 = vpack.c.bf16 %v38, %v37
  %v67 = vpack.c.bf16 %v40, %v39
  %v68 = vpack.c.bf16 %v42, %v41
  %v69 = vpack.c.bf16 %v44, %v43
  %v70 = vpack.c.bf16 %v46, %v45
  %v71 = vpack.c.bf16 %v48, %v47
  %v72 = vpack.c.bf16 %v50, %v49
  %v73 = vpack.c.bf16 %v52, %v51
  %v74 = vpack.c.bf16 %v54, %v53
  %v75 = vld [vmem:[%s1] sm:$0x3]
  %v76 = vld [vmem:[%s0 + $0x2] sm:$0xff]
  %v77 = vld [vmem:[%s0 + $0xa] sm:$0xff]
  %v78 = vld [vmem:[%s0 + $0x12] sm:$0xff]
  %v79 = vld [vmem:[%s0 + $0x1a] sm:$0xff]
  %v80 = vld [vmem:[%s0 + $0x22] sm:$0xff]
  %v81 = vld [vmem:[%s0 + $0x2a] sm:$0xff]
  %v82 = vld [vmem:[%s0 + $0x32] sm:$0xff]
  %v83 = vld [vmem:[%s0 + $0x3a] sm:$0xff]
  %v84 = vld [vmem:[%s0 + $0x42] sm:$0xff]
  %v85 = vld [vmem:[%s0 + $0x4a] sm:$0xff]
  %v86 = vld [vmem:[%s0 + $0x52] sm:$0xff]
  %v87 = vld [vmem:[%s0 + $0x5a] sm:$0xff]
  %v88 = vld [vmem:[%s0 + $0x62] sm:$0xff]
  %v89 = vld [vmem:[%s0 + $0x6a] sm:$0xff]
  %v90 = vld [vmem:[%s0 + $0x72] sm:$0xff]
  %v91 = vld [vmem:[%s0 + $0x7a] sm:$0xff]
  %v92 = vld [vmem:[%s0 + $0x82] sm:$0xff]
  %v93 = vld [vmem:[%s0 + $0x8a] sm:$0xff]
  %v94 = vld [vmem:[%s0 + $0x92] sm:$0xff]
  %v95 = vld [vmem:[%s0 + $0x9a] sm:$0xff]
  %v96 = vld [vmem:[%s0 + $0xa2] sm:$0xff]
  %v97 = vld [vmem:[%s0 + $0xaa] sm:$0xff]
  %v98 = vld [vmem:[%s0 + $0xb2] sm:$0xff]
  %v99 = vld [vmem:[%s0 + $0xba] sm:$0xff]
  %v100 = vld [vmem:[%s0 + $0xc2] sm:$0xff]
  %v101 = vld [vmem:[%s0 + $0xca] sm:$0xff]
  %v102 = vld [vmem:[%s0 + $0xd2] sm:$0xff]
  %v103 = vld [vmem:[%s0 + $0xda] sm:$0xff]
  %v104 = vld [vmem:[%s0 + $0xe2] sm:$0xff]
  %v105 = vld [vmem:[%s0 + $0xea] sm:$0xff]
  %v106 = vld [vmem:[%s0 + $0xf2] sm:$0xff]
  %v107 = vld [vmem:[%s0 + $0xfa] sm:$0xff]
  %v108 = vld [vmem:[%s0 + $0x102] sm:$0xff]
  %v109 = vld [vmem:[%s0 + $0x10a] sm:$0xff]
  %v110 = vld [vmem:[%s0 + $0x112] sm:$0xff]
  %v111 = vld [vmem:[%s0 + $0x11a] sm:$0xff]
  %v112 = vld [vmem:[%s0 + $0x122] sm:$0xff]
  %v113 = vld [vmem:[%s0 + $0x12a] sm:$0xff]
  %v114 = vld [vmem:[%s0 + $0x132] sm:$0xff]
  %v115 = vld [vmem:[%s0 + $0x13a] sm:$0xff]
  %v116 = vpack.c.bf16 %v77, %v76
  %v117 = vpack.c.bf16 %v79, %v78
  %v118 = vpack.c.bf16 %v81, %v80
  %v119 = vpack.c.bf16 %v83, %v82
  %v120 = vpack.c.bf16 %v85, %v84
  %v121 = vpack.c.bf16 %v87, %v86
  %v122 = vpack.c.bf16 %v89, %v88
  %v123 = vpack.c.bf16 %v91, %v90
  %v124 = vpack.c.bf16 %v93, %v92
  %v125 = vpack.c.bf16 %v95, %v94
  %v126 = vpack.c.bf16 %v97, %v96
  %v127 = vpack.c.bf16 %v99, %v98
  %v128 = vpack.c.bf16 %v101, %v100
  %v129 = vpack.c.bf16 %v103, %v102
  %v130 = vpack.c.bf16 %v105, %v104
  %v131 = vpack.c.bf16 %v107, %v106
  %v132 = vpack.c.bf16 %v109, %v108
  %v133 = vpack.c.bf16 %v111, %v110
  %v134 = vpack.c.bf16 %v113, %v112
  %v135 = vpack.c.bf16 %v115, %v114
  %s136 = scalar_lea.vmem %s1, 2
  %v137 = vld [vmem:[%s136] sm:$0x3]
  %vm138 = vcmask 31744
  %v140 = vsel %vm138, %v116, 0
  %v143 = vsel %vm138, %v117, 0
  %v146 = vsel %vm138, %v118, 0
  %v149 = vsel %vm138, %v119, 0
  %v152 = vsel %vm138, %v120, 0
  %v155 = vsel %vm138, %v121, 0
  %v158 = vsel %vm138, %v122, 0
  %v161 = vsel %vm138, %v123, 0
  %v164 = vsel %vm138, %v124, 0
  %v167 = vsel %vm138, %v125, 0
  %v170 = vsel %vm138, %v126, 0
  %v173 = vsel %vm138, %v127, 0
  %v176 = vsel %vm138, %v128, 0
  %v179 = vsel %vm138, %v129, 0
  %v182 = vsel %vm138, %v130, 0
  %v185 = vsel %vm138, %v131, 0
  %v188 = vsel %vm138, %v132, 0
  %v191 = vsel %vm138, %v133, 0
  %v194 = vsel %vm138, %v134, 0
  %v197 = vsel %vm138, %v135, 0
  %vm199 = vcmask 1041408
  %v201 = vsel %vm199, %v137, 0
  %203 = vmatpush.bf16.msra.mxu0 0
  %204 = vmatpush.bf16.msra.mxu0 0
  %205 = vmatpush.bf16.msra.mxu0 0
  %206 = vmatpush.bf16.msra.mxu0 0
  %207 = vmatpush.bf16.msra.mxu0 0
  %208 = vmatpush.bf16.msra.mxu0 0
  %209 = vmatpush.bf16.msra.mxu0 0
  %210 = vmatpush.bf16.msra.mxu0 %v201
  %211 = vmatmul.bf16.gmra.mxu0 %v140
  %v212 = vpop.f32.mrf.mxu0
  %v213 = vadd.f32 0.0, %v212
  %v214 = vpop.f32.mrf.mxu0
  %v215 = vadd.f32 0.0, %v214
  %216 = vmatmul.bf16.gmra.mxu0 %v143
  %v217 = vpop.f32.mrf.mxu0
  %v218 = vadd.f32 0.0, %v217
  %v219 = vpop.f32.mrf.mxu0
  %v220 = vadd.f32 0.0, %v219
  %221 = vmatmul.bf16.gmra.mxu0 %v146
  %v222 = vpop.f32.mrf.mxu0
  %v223 = vadd.f32 0.0, %v222
  %v224 = vpop.f32.mrf.mxu0
  %v225 = vadd.f32 0.0, %v224
  %226 = vmatmul.bf16.gmra.mxu0 %v149
  %v227 = vpop.f32.mrf.mxu0
  %v228 = vadd.f32 0.0, %v227
  %v229 = vpop.f32.mrf.mxu0
  %v230 = vadd.f32 0.0, %v229
  %231 = vmatmul.bf16.gmra.mxu0 %v152
  %v232 = vpop.f32.mrf.mxu0
  %v233 = vadd.f32 0.0, %v232
  %v234 = vpop.f32.mrf.mxu0
  %v235 = vadd.f32 0.0, %v234
  %236 = vmatmul.bf16.gmra.mxu0 %v155
  %v237 = vpop.f32.mrf.mxu0
  %v238 = vadd.f32 0.0, %v237
  %v239 = vpop.f32.mrf.mxu0
  %v240 = vadd.f32 0.0, %v239
  %241 = vmatmul.bf16.gmra.mxu0 %v158
  %v242 = vpop.f32.mrf.mxu0
  %v243 = vadd.f32 0.0, %v242
  %v244 = vpop.f32.mrf.mxu0
  %v245 = vadd.f32 0.0, %v244
  %246 = vmatmul.bf16.gmra.mxu0 %v161
  %v247 = vpop.f32.mrf.mxu0
  %v248 = vadd.f32 0.0, %v247
  %v249 = vpop.f32.mrf.mxu0
  %v250 = vadd.f32 0.0, %v249
  %251 = vmatmul.bf16.gmra.mxu0 %v164
  %v252 = vpop.f32.mrf.mxu0
  %v253 = vadd.f32 0.0, %v252
  %v254 = vpop.f32.mrf.mxu0
  %v255 = vadd.f32 0.0, %v254
  %256 = vmatmul.bf16.gmra.mxu0 %v167
  %v257 = vpop.f32.mrf.mxu0
  %v258 = vadd.f32 0.0, %v257
  %v259 = vpop.f32.mrf.mxu0
  %v260 = vadd.f32 0.0, %v259
  %261 = vmatmul.bf16.gmra.mxu0 %v170
  %v262 = vpop.f32.mrf.mxu0
  %v263 = vadd.f32 0.0, %v262
  %v264 = vpop.f32.mrf.mxu0
  %v265 = vadd.f32 0.0, %v264
  %266 = vmatmul.bf16.gmra.mxu0 %v173
  %v267 = vpop.f32.mrf.mxu0
  %v268 = vadd.f32 0.0, %v267
  %v269 = vpop.f32.mrf.mxu0
  %v270 = vadd.f32 0.0, %v269
  %271 = vmatmul.bf16.gmra.mxu0 %v176
  %v272 = vpop.f32.mrf.mxu0
  %v273 = vadd.f32 0.0, %v272
  %v274 = vpop.f32.mrf.mxu0
  %v275 = vadd.f32 0.0, %v274
  %276 = vmatmul.bf16.gmra.mxu0 %v179
  %v277 = vpop.f32.mrf.mxu0
  %v278 = vadd.f32 0.0, %v277
  %v279 = vpop.f32.mrf.mxu0
  %v280 = vadd.f32 0.0, %v279
  %281 = vmatmul.bf16.gmra.mxu0 %v182
  %v282 = vpop.f32.mrf.mxu0
  %v283 = vadd.f32 0.0, %v282
  %v284 = vpop.f32.mrf.mxu0
  %v285 = vadd.f32 0.0, %v284
  %286 = vmatmul.bf16.gmra.mxu0 %v185
  %v287 = vpop.f32.mrf.mxu0
  %v288 = vadd.f32 0.0, %v287
  %v289 = vpop.f32.mrf.mxu0
  %v290 = vadd.f32 0.0, %v289
  %291 = vmatmul.bf16.gmra.mxu0 %v188
  %v292 = vpop.f32.mrf.mxu0
  %v293 = vadd.f32 0.0, %v292
  %v294 = vpop.f32.mrf.mxu0
  %v295 = vadd.f32 0.0, %v294
  %296 = vmatmul.bf16.gmra.mxu0 %v191
  %v297 = vpop.f32.mrf.mxu0
  %v298 = vadd.f32 0.0, %v297
  %v299 = vpop.f32.mrf.mxu0
  %v300 = vadd.f32 0.0, %v299
  %301 = vmatmul.bf16.gmra.mxu0 %v194
  %v302 = vpop.f32.mrf.mxu0
  %v303 = vadd.f32 0.0, %v302
  %v304 = vpop.f32.mrf.mxu0
  %v305 = vadd.f32 0.0, %v304
  %306 = vmatmul.bf16.gmra.mxu0 %v197
  %v307 = vpop.f32.mrf.mxu0
  %v308 = vadd.f32 0.0, %v307
  %v309 = vpop.f32.mrf.mxu0
  %v310 = vadd.f32 0.0, %v309
  %311 = vdwg.mxu0
  %v313 = vsel %vm138, %v55, 0
  %v316 = vsel %vm138, %v56, 0
  %v319 = vsel %vm138, %v57, 0
  %v322 = vsel %vm138, %v58, 0
  %v325 = vsel %vm138, %v59, 0
  %v328 = vsel %vm138, %v60, 0
  %v331 = vsel %vm138, %v61, 0
  %v334 = vsel %vm138, %v62, 0
  %v337 = vsel %vm138, %v63, 0
  %v340 = vsel %vm138, %v64, 0
  %v343 = vsel %vm138, %v65, 0
  %v346 = vsel %vm138, %v66, 0
  %v349 = vsel %vm138, %v67, 0
  %v352 = vsel %vm138, %v68, 0
  %v355 = vsel %vm138, %v69, 0
  %v358 = vsel %vm138, %v70, 0
  %v361 = vsel %vm138, %v71, 0
  %v364 = vsel %vm138, %v72, 0
  %v367 = vsel %vm138, %v73, 0
  %v370 = vsel %vm138, %v74, 0
  %v373 = vsel %vm199, %v75, 0
  %375 = vmatpush.bf16.msra.mxu0 0
  %376 = vmatpush.bf16.msra.mxu0 0
  %377 = vmatpush.bf16.msra.mxu0 0
  %378 = vmatpush.bf16.msra.mxu0 0
  %379 = vmatpush.bf16.msra.mxu0 0
  %380 = vmatpush.bf16.msra.mxu0 0
  %381 = vmatpush.bf16.msra.mxu0 0
  %382 = vmatpush.bf16.msra.mxu0 %v373
  %383 = vmatmul.bf16.gmra.mxu0 %v313
  %v384 = vpop.f32.mrf.mxu0
  %v385 = vadd.f32 %v213, %v384
  %v386 = vpop.f32.mrf.mxu0
  %v387 = vadd.f32 %v215, %v386
  %388 = vmatmul.bf16.gmra.mxu0 %v316
  %v389 = vpop.f32.mrf.mxu0
  %v390 = vadd.f32 %v218, %v389
  %v391 = vpop.f32.mrf.mxu0
  %v392 = vadd.f32 %v220, %v391
  %393 = vmatmul.bf16.gmra.mxu0 %v319
  %v394 = vpop.f32.mrf.mxu0
  %v395 = vadd.f32 %v223, %v394
  %v396 = vpop.f32.mrf.mxu0
  %v397 = vadd.f32 %v225, %v396
  %398 = vmatmul.bf16.gmra.mxu0 %v322
  %v399 = vpop.f32.mrf.mxu0
  %v400 = vadd.f32 %v228, %v399
  %v401 = vpop.f32.mrf.mxu0
  %v402 = vadd.f32 %v230, %v401
  %403 = vmatmul.bf16.gmra.mxu0 %v325
  %v404 = vpop.f32.mrf.mxu0
  %v405 = vadd.f32 %v233, %v404
  %v406 = vpop.f32.mrf.mxu0
  %v407 = vadd.f32 %v235, %v406
  %408 = vmatmul.bf16.gmra.mxu0 %v328
  %v409 = vpop.f32.mrf.mxu0
  %v410 = vadd.f32 %v238, %v409
  %v411 = vpop.f32.mrf.mxu0
  %v412 = vadd.f32 %v240, %v411
  %413 = vmatmul.bf16.gmra.mxu0 %v331
  %v414 = vpop.f32.mrf.mxu0
  %v415 = vadd.f32 %v243, %v414
  %v416 = vpop.f32.mrf.mxu0
  %v417 = vadd.f32 %v245, %v416
  %418 = vmatmul.bf16.gmra.mxu0 %v334
  %v419 = vpop.f32.mrf.mxu0
  %v420 = vadd.f32 %v248, %v419
  %v421 = vpop.f32.mrf.mxu0
  %v422 = vadd.f32 %v250, %v421
  %423 = vmatmul.bf16.gmra.mxu0 %v337
  %v424 = vpop.f32.mrf.mxu0
  %v425 = vadd.f32 %v253, %v424
  %v426 = vpop.f32.mrf.mxu0
  %v427 = vadd.f32 %v255, %v426
  %428 = vmatmul.bf16.gmra.mxu0 %v340
  %v429 = vpop.f32.mrf.mxu0
  %v430 = vadd.f32 %v258, %v429
  %v431 = vpop.f32.mrf.mxu0
  %v432 = vadd.f32 %v260, %v431
  %433 = vmatmul.bf16.gmra.mxu0 %v343
  %v434 = vpop.f32.mrf.mxu0
  %v435 = vadd.f32 %v263, %v434
  %v436 = vpop.f32.mrf.mxu0
  %v437 = vadd.f32 %v265, %v436
  %438 = vmatmul.bf16.gmra.mxu0 %v346
  %v439 = vpop.f32.mrf.mxu0
  %v440 = vadd.f32 %v268, %v439
  %v441 = vpop.f32.mrf.mxu0
  %v442 = vadd.f32 %v270, %v441
  %443 = vmatmul.bf16.gmra.mxu0 %v349
  %v444 = vpop.f32.mrf.mxu0
  %v445 = vadd.f32 %v273, %v444
  %v446 = vpop.f32.mrf.mxu0
  %v447 = vadd.f32 %v275, %v446
  %448 = vmatmul.bf16.gmra.mxu0 %v352
  %v449 = vpop.f32.mrf.mxu0
  %v450 = vadd.f32 %v278, %v449
  %v451 = vpop.f32.mrf.mxu0
  %v452 = vadd.f32 %v280, %v451
  %453 = vmatmul.bf16.gmra.mxu0 %v355
  %v454 = vpop.f32.mrf.mxu0
  %v455 = vadd.f32 %v283, %v454
  %v456 = vpop.f32.mrf.mxu0
  %v457 = vadd.f32 %v285, %v456
  %458 = vmatmul.bf16.gmra.mxu0 %v358
  %v459 = vpop.f32.mrf.mxu0
  %v460 = vadd.f32 %v288, %v459
  %v461 = vpop.f32.mrf.mxu0
  %v462 = vadd.f32 %v290, %v461
  %463 = vmatmul.bf16.gmra.mxu0 %v361
  %v464 = vpop.f32.mrf.mxu0
  %v465 = vadd.f32 %v293, %v464
  %v466 = vpop.f32.mrf.mxu0
  %v467 = vadd.f32 %v295, %v466
  %468 = vmatmul.bf16.gmra.mxu0 %v364
  %v469 = vpop.f32.mrf.mxu0
  %v470 = vadd.f32 %v298, %v469
  %v471 = vpop.f32.mrf.mxu0
  %v472 = vadd.f32 %v300, %v471
  %473 = vmatmul.bf16.gmra.mxu0 %v367
  %v474 = vpop.f32.mrf.mxu0
  %v475 = vadd.f32 %v303, %v474
  %v476 = vpop.f32.mrf.mxu0
  %v477 = vadd.f32 %v305, %v476
  %478 = vmatmul.bf16.gmra.mxu0 %v370
  %v479 = vpop.f32.mrf.mxu0
  %v480 = vadd.f32 %v308, %v479
  %v481 = vpop.f32.mrf.mxu0
  %v482 = vadd.f32 %v310, %v481
  %483 = vdwg.mxu0
  %v484 = vld [vmem:[%s0 + $0x4] sm:$0xff]
  %v485 = vld [vmem:[%s0 + $0xc] sm:$0xff]
  %v486 = vld [vmem:[%s0 + $0x14] sm:$0xff]
  %v487 = vld [vmem:[%s0 + $0x1c] sm:$0xff]
  %v488 = vld [vmem:[%s0 + $0x24] sm:$0xff]
  %v489 = vld [vmem:[%s0 + $0x2c] sm:$0xff]
  %v490 = vld [vmem:[%s0 + $0x34] sm:$0xff]
  %v491 = vld [vmem:[%s0 + $0x3c] sm:$0xff]
  %v492 = vld [vmem:[%s0 + $0x44] sm:$0xff]
  %v493 = vld [vmem:[%s0 + $0x4c] sm:$0xff]
  %v494 = vld [vmem:[%s0 + $0x54] sm:$0xff]
  %v495 = vld [vmem:[%s0 + $0x5c] sm:$0xff]
  %v496 = vld [vmem:[%s0 + $0x64] sm:$0xff]
  %v497 = vld [vmem:[%s0 + $0x6c] sm:$0xff]
  %v498 = vld [vmem:[%s0 + $0x74] sm:$0xff]
  %v499 = vld [vmem:[%s0 + $0x7c] sm:$0xff]
  %v500 = vld [vmem:[%s0 + $0x84] sm:$0xff]
  %v501 = vld [vmem:[%s0 + $0x8c] sm:$0xff]
  %v502 = vld [vmem:[%s0 + $0x94] sm:$0xff]
  %v503 = vld [vmem:[%s0 + $0x9c] sm:$0xff]
  %v504 = vld [vmem:[%s0 + $0xa4] sm:$0xff]
  %v505 = vld [vmem:[%s0 + $0xac] sm:$0xff]
  %v506 = vld [vmem:[%s0 + $0xb4] sm:$0xff]
  %v507 = vld [vmem:[%s0 + $0xbc] sm:$0xff]
  %v508 = vld [vmem:[%s0 + $0xc4] sm:$0xff]
  %v509 = vld [vmem:[%s0 + $0xcc] sm:$0xff]
  %v510 = vld [vmem:[%s0 + $0xd4] sm:$0xff]
  %v511 = vld [vmem:[%s0 + $0xdc] sm:$0xff]
  %v512 = vld [vmem:[%s0 + $0xe4] sm:$0xff]
  %v513 = vld [vmem:[%s0 + $0xec] sm:$0xff]
  %v514 = vld [vmem:[%s0 + $0xf4] sm:$0xff]
  %v515 = vld [vmem:[%s0 + $0xfc] sm:$0xff]
  %v516 = vld [vmem:[%s0 + $0x104] sm:$0xff]
  %v517 = vld [vmem:[%s0 + $0x10c] sm:$0xff]
  %v518 = vld [vmem:[%s0 + $0x114] sm:$0xff]
  %v519 = vld [vmem:[%s0 + $0x11c] sm:$0xff]
  %v520 = vld [vmem:[%s0 + $0x124] sm:$0xff]
  %v521 = vld [vmem:[%s0 + $0x12c] sm:$0xff]
  %v522 = vld [vmem:[%s0 + $0x134] sm:$0xff]
  %v523 = vld [vmem:[%s0 + $0x13c] sm:$0xff]
  %v524 = vpack.c.bf16 %v485, %v484
  %v525 = vpack.c.bf16 %v487, %v486
  %v526 = vpack.c.bf16 %v489, %v488
  %v527 = vpack.c.bf16 %v491, %v490
  %v528 = vpack.c.bf16 %v493, %v492
  %v529 = vpack.c.bf16 %v495, %v494
  %v530 = vpack.c.bf16 %v497, %v496
  %v531 = vpack.c.bf16 %v499, %v498
  %v532 = vpack.c.bf16 %v501, %v500
  %v533 = vpack.c.bf16 %v503, %v502
  %v534 = vpack.c.bf16 %v505, %v504
  %v535 = vpack.c.bf16 %v507, %v506
  %v536 = vpack.c.bf16 %v509, %v508
  %v537 = vpack.c.bf16 %v511, %v510
  %v538 = vpack.c.bf16 %v513, %v512
  %v539 = vpack.c.bf16 %v515, %v514
  %v540 = vpack.c.bf16 %v517, %v516
  %v541 = vpack.c.bf16 %v519, %v518
  %v542 = vpack.c.bf16 %v521, %v520
  %v543 = vpack.c.bf16 %v523, %v522
  %s544 = scalar_lea.vmem %s1, 4
  %v545 = vld [vmem:[%s544] sm:$0x3]
  %v547 = vsel %vm138, %v524, 0
  %v550 = vsel %vm138, %v525, 0
  %v553 = vsel %vm138, %v526, 0
  %v556 = vsel %vm138, %v527, 0
  %v559 = vsel %vm138, %v528, 0
  %v562 = vsel %vm138, %v529, 0
  %v565 = vsel %vm138, %v530, 0
  %v568 = vsel %vm138, %v531, 0
  %v571 = vsel %vm138, %v532, 0
  %v574 = vsel %vm138, %v533, 0
  %v577 = vsel %vm138, %v534, 0
  %v580 = vsel %vm138, %v535, 0
  %v583 = vsel %vm138, %v536, 0
  %v586 = vsel %vm138, %v537, 0
  %v589 = vsel %vm138, %v538, 0
  %v592 = vsel %vm138, %v539, 0
  %v595 = vsel %vm138, %v540, 0
  %v598 = vsel %vm138, %v541, 0
  %v601 = vsel %vm138, %v542, 0
  %v604 = vsel %vm138, %v543, 0
  %v607 = vsel %vm199, %v545, 0
  %609 = vmatpush.bf16.msra.mxu0 0
  %610 = vmatpush.bf16.msra.mxu0 0
  %611 = vmatpush.bf16.msra.mxu0 0
  %612 = vmatpush.bf16.msra.mxu0 0
  %613 = vmatpush.bf16.msra.mxu0 0
  %614 = vmatpush.bf16.msra.mxu0 0
  %615 = vmatpush.bf16.msra.mxu0 0
  %616 = vmatpush.bf16.msra.mxu0 %v607
  %617 = vmatmul.bf16.gmra.mxu0 %v547
  %v618 = vpop.f32.mrf.mxu0
  %v619 = vadd.f32 0.0, %v618
  %v620 = vpop.f32.mrf.mxu0
  %v621 = vadd.f32 0.0, %v620
  %622 = vmatmul.bf16.gmra.mxu0 %v550
  %v623 = vpop.f32.mrf.mxu0
  %v624 = vadd.f32 0.0, %v623
  %v625 = vpop.f32.mrf.mxu0
  %v626 = vadd.f32 0.0, %v625
  %627 = vmatmul.bf16.gmra.mxu0 %v553
  %v628 = vpop.f32.mrf.mxu0
  %v629 = vadd.f32 0.0, %v628
  %v630 = vpop.f32.mrf.mxu0
  %v631 = vadd.f32 0.0, %v630
  %632 = vmatmul.bf16.gmra.mxu0 %v556
  %v633 = vpop.f32.mrf.mxu0
  %v634 = vadd.f32 0.0, %v633
  %v635 = vpop.f32.mrf.mxu0
  %v636 = vadd.f32 0.0, %v635
  %637 = vmatmul.bf16.gmra.mxu0 %v559
  %v638 = vpop.f32.mrf.mxu0
  %v639 = vadd.f32 0.0, %v638
  %v640 = vpop.f32.mrf.mxu0
  %v641 = vadd.f32 0.0, %v640
  %642 = vmatmul.bf16.gmra.mxu0 %v562
  %v643 = vpop.f32.mrf.mxu0
  %v644 = vadd.f32 0.0, %v643
  %v645 = vpop.f32.mrf.mxu0
  %v646 = vadd.f32 0.0, %v645
  %647 = vmatmul.bf16.gmra.mxu0 %v565
  %v648 = vpop.f32.mrf.mxu0
  %v649 = vadd.f32 0.0, %v648
  %v650 = vpop.f32.mrf.mxu0
  %v651 = vadd.f32 0.0, %v650
  %652 = vmatmul.bf16.gmra.mxu0 %v568
  %v653 = vpop.f32.mrf.mxu0
  %v654 = vadd.f32 0.0, %v653
  %v655 = vpop.f32.mrf.mxu0
  %v656 = vadd.f32 0.0, %v655
  %657 = vmatmul.bf16.gmra.mxu0 %v571
  %v658 = vpop.f32.mrf.mxu0
  %v659 = vadd.f32 0.0, %v658
  %v660 = vpop.f32.mrf.mxu0
  %v661 = vadd.f32 0.0, %v660
  %662 = vmatmul.bf16.gmra.mxu0 %v574
  %v663 = vpop.f32.mrf.mxu0
  %v664 = vadd.f32 0.0, %v663
  %v665 = vpop.f32.mrf.mxu0
  %v666 = vadd.f32 0.0, %v665
  %667 = vmatmul.bf16.gmra.mxu0 %v577
  %v668 = vpop.f32.mrf.mxu0
  %v669 = vadd.f32 0.0, %v668
  %v670 = vpop.f32.mrf.mxu0
  %v671 = vadd.f32 0.0, %v670
  %672 = vmatmul.bf16.gmra.mxu0 %v580
  %v673 = vpop.f32.mrf.mxu0
  %v674 = vadd.f32 0.0, %v673
  %v675 = vpop.f32.mrf.mxu0
  %v676 = vadd.f32 0.0, %v675
  %677 = vmatmul.bf16.gmra.mxu0 %v583
  %v678 = vpop.f32.mrf.mxu0
  %v679 = vadd.f32 0.0, %v678
  %v680 = vpop.f32.mrf.mxu0
  %v681 = vadd.f32 0.0, %v680
  %682 = vmatmul.bf16.gmra.mxu0 %v586
  %v683 = vpop.f32.mrf.mxu0
  %v684 = vadd.f32 0.0, %v683
  %v685 = vpop.f32.mrf.mxu0
  %v686 = vadd.f32 0.0, %v685
  %687 = vmatmul.bf16.gmra.mxu0 %v589
  %v688 = vpop.f32.mrf.mxu0
  %v689 = vadd.f32 0.0, %v688
  %v690 = vpop.f32.mrf.mxu0
  %v691 = vadd.f32 0.0, %v690
  %692 = vmatmul.bf16.gmra.mxu0 %v592
  %v693 = vpop.f32.mrf.mxu0
  %v694 = vadd.f32 0.0, %v693
  %v695 = vpop.f32.mrf.mxu0
  %v696 = vadd.f32 0.0, %v695
  %697 = vmatmul.bf16.gmra.mxu0 %v595
  %v698 = vpop.f32.mrf.mxu0
  %v699 = vadd.f32 0.0, %v698
  %v700 = vpop.f32.mrf.mxu0
  %v701 = vadd.f32 0.0, %v700
  %702 = vmatmul.bf16.gmra.mxu0 %v598
  %v703 = vpop.f32.mrf.mxu0
  %v704 = vadd.f32 0.0, %v703
  %v705 = vpop.f32.mrf.mxu0
  %v706 = vadd.f32 0.0, %v705
  %707 = vmatmul.bf16.gmra.mxu0 %v601
  %v708 = vpop.f32.mrf.mxu0
  %v709 = vadd.f32 0.0, %v708
  %v710 = vpop.f32.mrf.mxu0
  %v711 = vadd.f32 0.0, %v710
  %712 = vmatmul.bf16.gmra.mxu0 %v604
  %v713 = vpop.f32.mrf.mxu0
  %v714 = vadd.f32 0.0, %v713
  %v715 = vpop.f32.mrf.mxu0
  %v716 = vadd.f32 0.0, %v715
  %717 = vdwg.mxu0
  %v718 = vadd.f32 %v385, %v619
  %v719 = vadd.f32 %v387, %v621
  %v720 = vadd.f32 %v390, %v624
  %v721 = vadd.f32 %v392, %v626
  %v722 = vadd.f32 %v395, %v629
  %v723 = vadd.f32 %v397, %v631
  %v724 = vadd.f32 %v400, %v634
  %v725 = vadd.f32 %v402, %v636
  %v726 = vadd.f32 %v405, %v639
  %v727 = vadd.f32 %v407, %v641
  %v728 = vadd.f32 %v410, %v644
  %v729 = vadd.f32 %v412, %v646
  %v730 = vadd.f32 %v415, %v649
  %v731 = vadd.f32 %v417, %v651
  %v732 = vadd.f32 %v420, %v654
  %v733 = vadd.f32 %v422, %v656
  %v734 = vadd.f32 %v425, %v659
  %v735 = vadd.f32 %v427, %v661
  %v736 = vadd.f32 %v430, %v664
  %v737 = vadd.f32 %v432, %v666
  %v738 = vadd.f32 %v435, %v669
  %v739 = vadd.f32 %v437, %v671
  %v740 = vadd.f32 %v440, %v674
  %v741 = vadd.f32 %v442, %v676
  %v742 = vadd.f32 %v445, %v679
  %v743 = vadd.f32 %v447, %v681
  %v744 = vadd.f32 %v450, %v684
  %v745 = vadd.f32 %v452, %v686
  %v746 = vadd.f32 %v455, %v689
  %v747 = vadd.f32 %v457, %v691
  %v748 = vadd.f32 %v460, %v694
  %v749 = vadd.f32 %v462, %v696
  %v750 = vadd.f32 %v465, %v699
  %v751 = vadd.f32 %v467, %v701
  %v752 = vadd.f32 %v470, %v704
  %v753 = vadd.f32 %v472, %v706
  %v754 = vadd.f32 %v475, %v709
  %v755 = vadd.f32 %v477, %v711
  %v756 = vadd.f32 %v480, %v714
  %v757 = vadd.f32 %v482, %v716
  %v758 = vld [vmem:[%s0 + $0x28] sm:$0xff]
  %v759 = vld [vmem:[%s0 + $0x30] sm:$0xff]
  %v760 = vld [vmem:[%s0 + $0x38] sm:$0xff]
  %v761 = vld [vmem:[%s0 + $0x40] sm:$0xff]
  %v762 = vld [vmem:[%s0 + $0x48] sm:$0xff]
  %v763 = vld [vmem:[%s0 + $0x50] sm:$0xff]
  %v764 = vld [vmem:[%s0 + $0x58] sm:$0xff]
  %v765 = vld [vmem:[%s0 + $0x60] sm:$0xff]
  %v766 = vld [vmem:[%s0 + $0x68] sm:$0xff]
  %v767 = vld [vmem:[%s0 + $0x70] sm:$0xff]
  %v768 = vld [vmem:[%s0 + $0x78] sm:$0xff]
  %v769 = vld [vmem:[%s0 + $0x80] sm:$0xff]
  %v770 = vld [vmem:[%s0 + $0x88] sm:$0xff]
  %v771 = vld [vmem:[%s0 + $0x90] sm:$0xff]
  %v772 = vld [vmem:[%s0 + $0x98] sm:$0xff]
  %v773 = vld [vmem:[%s0 + $0xa0] sm:$0xff]
  %v774 = vld [vmem:[%s0 + $0xa8] sm:$0xff]
  %v775 = vld [vmem:[%s0 + $0xb0] sm:$0xff]
  %v776 = vld [vmem:[%s0 + $0xb8] sm:$0xff]
  %v777 = vld [vmem:[%s0 + $0xc0] sm:$0xff]
  %v778 = vld [vmem:[%s0 + $0xc8] sm:$0xff]
  %v779 = vld [vmem:[%s0 + $0xd0] sm:$0xff]
  %v780 = vld [vmem:[%s0 + $0xd8] sm:$0xff]
  %v781 = vld [vmem:[%s0 + $0xe0] sm:$0xff]
  %v782 = vld [vmem:[%s0 + $0xe8] sm:$0xff]
  %v783 = vld [vmem:[%s0 + $0xf0] sm:$0xff]
  %v784 = vld [vmem:[%s0 + $0xf8] sm:$0xff]
  %v785 = vld [vmem:[%s0 + $0x100] sm:$0xff]
  %v786 = vld [vmem:[%s0 + $0x108] sm:$0xff]
  %v787 = vld [vmem:[%s0 + $0x110] sm:$0xff]
  %v788 = vld [vmem:[%s0 + $0x118] sm:$0xff]
  %v789 = vld [vmem:[%s0 + $0x120] sm:$0xff]
  %v790 = vld [vmem:[%s0 + $0x128] sm:$0xff]
  %v791 = vld [vmem:[%s0 + $0x130] sm:$0xff]
  %v792 = vld [vmem:[%s0 + $0x138] sm:$0xff]
  %v793 = vld [vmem:[%s0 + $0x140] sm:$0xff]
  %v794 = vld [vmem:[%s0 + $0x148] sm:$0xff]
  %v795 = vld [vmem:[%s0 + $0x150] sm:$0xff]
  %v796 = vld [vmem:[%s0 + $0x158] sm:$0xff]
  %v797 = vld [vmem:[%s0 + $0x160] sm:$0xff]
  %v798 = vpack.c.bf16 %v759, %v758
  %v799 = vpack.c.bf16 %v761, %v760
  %v800 = vpack.c.bf16 %v763, %v762
  %v801 = vpack.c.bf16 %v765, %v764
  %v802 = vpack.c.bf16 %v767, %v766
  %v803 = vpack.c.bf16 %v769, %v768
  %v804 = vpack.c.bf16 %v771, %v770
  %v805 = vpack.c.bf16 %v773, %v772
  %v806 = vpack.c.bf16 %v775, %v774
  %v807 = vpack.c.bf16 %v777, %v776
  %v808 = vpack.c.bf16 %v779, %v778
  %v809 = vpack.c.bf16 %v781, %v780
  %v810 = vpack.c.bf16 %v783, %v782
  %v811 = vpack.c.bf16 %v785, %v784
  %v812 = vpack.c.bf16 %v787, %v786
  %v813 = vpack.c.bf16 %v789, %v788
  %v814 = vpack.c.bf16 %v791, %v790
  %v815 = vpack.c.bf16 %v793, %v792
  %v816 = vpack.c.bf16 %v795, %v794
  %v817 = vpack.c.bf16 %v797, %v796
  %s818 = scalar_lea.vmem %s1, 6
  %v819 = vld [vmem:[%s818] sm:$0x3]
  %v821 = vsel %vm138, %v798, 0
  %v824 = vsel %vm138, %v799, 0
  %v827 = vsel %vm138, %v800, 0
  %v830 = vsel %vm138, %v801, 0
  %v833 = vsel %vm138, %v802, 0
  %v836 = vsel %vm138, %v803, 0
  %v839 = vsel %vm138, %v804, 0
  %v842 = vsel %vm138, %v805, 0
  %v845 = vsel %vm138, %v806, 0
  %v848 = vsel %vm138, %v807, 0
  %v851 = vsel %vm138, %v808, 0
  %v854 = vsel %vm138, %v809, 0
  %v857 = vsel %vm138, %v810, 0
  %v860 = vsel %vm138, %v811, 0
  %v863 = vsel %vm138, %v812, 0
  %v866 = vsel %vm138, %v813, 0
  %v869 = vsel %vm138, %v814, 0
  %v872 = vsel %vm138, %v815, 0
  %v875 = vsel %vm138, %v816, 0
  %v878 = vsel %vm138, %v817, 0
  %v881 = vsel %vm199, %v819, 0
  %883 = vmatpush.bf16.msra.mxu0 0
  %884 = vmatpush.bf16.msra.mxu0 0
  %885 = vmatpush.bf16.msra.mxu0 0
  %886 = vmatpush.bf16.msra.mxu0 0
  %887 = vmatpush.bf16.msra.mxu0 0
  %888 = vmatpush.bf16.msra.mxu0 0
  %889 = vmatpush.bf16.msra.mxu0 0
  %890 = vmatpush.bf16.msra.mxu0 %v881
  %891 = vmatmul.bf16.gmra.mxu0 %v821
  %v892 = vpop.f32.mrf.mxu0
  %v893 = vadd.f32 0.0, %v892
  %v894 = vpop.f32.mrf.mxu0
  %v895 = vadd.f32 0.0, %v894
  %896 = vmatmul.bf16.gmra.mxu0 %v824
  %v897 = vpop.f32.mrf.mxu0
  %v898 = vadd.f32 0.0, %v897
  %v899 = vpop.f32.mrf.mxu0
  %v900 = vadd.f32 0.0, %v899
  %901 = vmatmul.bf16.gmra.mxu0 %v827
  %v902 = vpop.f32.mrf.mxu0
  %v903 = vadd.f32 0.0, %v902
  %v904 = vpop.f32.mrf.mxu0
  %v905 = vadd.f32 0.0, %v904
  %906 = vmatmul.bf16.gmra.mxu0 %v830
  %v907 = vpop.f32.mrf.mxu0
  %v908 = vadd.f32 0.0, %v907
  %v909 = vpop.f32.mrf.mxu0
  %v910 = vadd.f32 0.0, %v909
  %911 = vmatmul.bf16.gmra.mxu0 %v833
  %v912 = vpop.f32.mrf.mxu0
  %v913 = vadd.f32 0.0, %v912
  %v914 = vpop.f32.mrf.mxu0
  %v915 = vadd.f32 0.0, %v914
  %916 = vmatmul.bf16.gmra.mxu0 %v836
  %v917 = vpop.f32.mrf.mxu0
  %v918 = vadd.f32 0.0, %v917
  %v919 = vpop.f32.mrf.mxu0
  %v920 = vadd.f32 0.0, %v919
  %921 = vmatmul.bf16.gmra.mxu0 %v839
  %v922 = vpop.f32.mrf.mxu0
  %v923 = vadd.f32 0.0, %v922
  %v924 = vpop.f32.mrf.mxu0
  %v925 = vadd.f32 0.0, %v924
  %926 = vmatmul.bf16.gmra.mxu0 %v842
  %v927 = vpop.f32.mrf.mxu0
  %v928 = vadd.f32 0.0, %v927
  %v929 = vpop.f32.mrf.mxu0
  %v930 = vadd.f32 0.0, %v929
  %931 = vmatmul.bf16.gmra.mxu0 %v845
  %v932 = vpop.f32.mrf.mxu0
  %v933 = vadd.f32 0.0, %v932
  %v934 = vpop.f32.mrf.mxu0
  %v935 = vadd.f32 0.0, %v934
  %936 = vmatmul.bf16.gmra.mxu0 %v848
  %v937 = vpop.f32.mrf.mxu0
  %v938 = vadd.f32 0.0, %v937
  %v939 = vpop.f32.mrf.mxu0
  %v940 = vadd.f32 0.0, %v939
  %941 = vmatmul.bf16.gmra.mxu0 %v851
  %v942 = vpop.f32.mrf.mxu0
  %v943 = vadd.f32 0.0, %v942
  %v944 = vpop.f32.mrf.mxu0
  %v945 = vadd.f32 0.0, %v944
  %946 = vmatmul.bf16.gmra.mxu0 %v854
  %v947 = vpop.f32.mrf.mxu0
  %v948 = vadd.f32 0.0, %v947
  %v949 = vpop.f32.mrf.mxu0
  %v950 = vadd.f32 0.0, %v949
  %951 = vmatmul.bf16.gmra.mxu0 %v857
  %v952 = vpop.f32.mrf.mxu0
  %v953 = vadd.f32 0.0, %v952
  %v954 = vpop.f32.mrf.mxu0
  %v955 = vadd.f32 0.0, %v954
  %956 = vmatmul.bf16.gmra.mxu0 %v860
  %v957 = vpop.f32.mrf.mxu0
  %v958 = vadd.f32 0.0, %v957
  %v959 = vpop.f32.mrf.mxu0
  %v960 = vadd.f32 0.0, %v959
  %961 = vmatmul.bf16.gmra.mxu0 %v863
  %v962 = vpop.f32.mrf.mxu0
  %v963 = vadd.f32 0.0, %v962
  %v964 = vpop.f32.mrf.mxu0
  %v965 = vadd.f32 0.0, %v964
  %966 = vmatmul.bf16.gmra.mxu0 %v866
  %v967 = vpop.f32.mrf.mxu0
  %v968 = vadd.f32 0.0, %v967
  %v969 = vpop.f32.mrf.mxu0
  %v970 = vadd.f32 0.0, %v969
  %971 = vmatmul.bf16.gmra.mxu0 %v869
  %v972 = vpop.f32.mrf.mxu0
  %v973 = vadd.f32 0.0, %v972
  %v974 = vpop.f32.mrf.mxu0
  %v975 = vadd.f32 0.0, %v974
  %976 = vmatmul.bf16.gmra.mxu0 %v872
  %v977 = vpop.f32.mrf.mxu0
  %v978 = vadd.f32 0.0, %v977
  %v979 = vpop.f32.mrf.mxu0
  %v980 = vadd.f32 0.0, %v979
  %981 = vmatmul.bf16.gmra.mxu0 %v875
  %v982 = vpop.f32.mrf.mxu0
  %v983 = vadd.f32 0.0, %v982
  %v984 = vpop.f32.mrf.mxu0
  %v985 = vadd.f32 0.0, %v984
  %986 = vmatmul.bf16.gmra.mxu0 %v878
  %v987 = vpop.f32.mrf.mxu0
  %v988 = vadd.f32 0.0, %v987
  %v989 = vpop.f32.mrf.mxu0
  %v990 = vadd.f32 0.0, %v989
  %991 = vdwg.mxu0
  %v992 = vadd.f32 %v718, %v893
  %v993 = vadd.f32 %v719, %v895
  %v994 = vadd.f32 %v720, %v898
  %v995 = vadd.f32 %v721, %v900
  %v996 = vadd.f32 %v722, %v903
  %v997 = vadd.f32 %v723, %v905
  %v998 = vadd.f32 %v724, %v908
  %v999 = vadd.f32 %v725, %v910
  %v1000 = vadd.f32 %v726, %v913
  %v1001 = vadd.f32 %v727, %v915
  %v1002 = vadd.f32 %v728, %v918
  %v1003 = vadd.f32 %v729, %v920
  %v1004 = vadd.f32 %v730, %v923
  %v1005 = vadd.f32 %v731, %v925
  %v1006 = vadd.f32 %v732, %v928
  %v1007 = vadd.f32 %v733, %v930
  %v1008 = vadd.f32 %v734, %v933
  %v1009 = vadd.f32 %v735, %v935
  %v1010 = vadd.f32 %v736, %v938
  %v1011 = vadd.f32 %v737, %v940
  %v1012 = vadd.f32 %v738, %v943
  %v1013 = vadd.f32 %v739, %v945
  %v1014 = vadd.f32 %v740, %v948
  %v1015 = vadd.f32 %v741, %v950
  %v1016 = vadd.f32 %v742, %v953
  %v1017 = vadd.f32 %v743, %v955
  %v1018 = vadd.f32 %v744, %v958
  %v1019 = vadd.f32 %v745, %v960
  %v1020 = vadd.f32 %v746, %v963
  %v1021 = vadd.f32 %v747, %v965
  %v1022 = vadd.f32 %v748, %v968
  %v1023 = vadd.f32 %v749, %v970
  %v1024 = vadd.f32 %v750, %v973
  %v1025 = vadd.f32 %v751, %v975
  %v1026 = vadd.f32 %v752, %v978
  %v1027 = vadd.f32 %v753, %v980
  %v1028 = vadd.f32 %v754, %v983
  %v1029 = vadd.f32 %v755, %v985
  %v1030 = vadd.f32 %v756, %v988
  %v1031 = vadd.f32 %v757, %v990
  %v1032 = vld [vmem:[%s0 + $0x2a] sm:$0xff]
  %v1033 = vld [vmem:[%s0 + $0x32] sm:$0xff]
  %v1034 = vld [vmem:[%s0 + $0x3a] sm:$0xff]
  %v1035 = vld [vmem:[%s0 + $0x42] sm:$0xff]
  %v1036 = vld [vmem:[%s0 + $0x4a] sm:$0xff]
  %v1037 = vld [vmem:[%s0 + $0x52] sm:$0xff]
  %v1038 = vld [vmem:[%s0 + $0x5a] sm:$0xff]
  %v1039 = vld [vmem:[%s0 + $0x62] sm:$0xff]
  %v1040 = vld [vmem:[%s0 + $0x6a] sm:$0xff]
  %v1041 = vld [vmem:[%s0 + $0x72] sm:$0xff]
  %v1042 = vld [vmem:[%s0 + $0x7a] sm:$0xff]
  %v1043 = vld [vmem:[%s0 + $0x82] sm:$0xff]
  %v1044 = vld [vmem:[%s0 + $0x8a] sm:$0xff]
  %v1045 = vld [vmem:[%s0 + $0x92] sm:$0xff]
  %v1046 = vld [vmem:[%s0 + $0x9a] sm:$0xff]
  %v1047 = vld [vmem:[%s0 + $0xa2] sm:$0xff]
  %v1048 = vld [vmem:[%s0 + $0xaa] sm:$0xff]
  %v1049 = vld [vmem:[%s0 + $0xb2] sm:$0xff]
  %v1050 = vld [vmem:[%s0 + $0xba] sm:$0xff]
  %v1051 = vld [vmem:[%s0 + $0xc2] sm:$0xff]
  %v1052 = vld [vmem:[%s0 + $0xca] sm:$0xff]
  %v1053 = vld [vmem:[%s0 + $0xd2] sm:$0xff]
  %v1054 = vld [vmem:[%s0 + $0xda] sm:$0xff]
  %v1055 = vld [vmem:[%s0 + $0xe2] sm:$0xff]
  %v1056 = vld [vmem:[%s0 + $0xea] sm:$0xff]
  %v1057 = vld [vmem:[%s0 + $0xf2] sm:$0xff]
  %v1058 = vld [vmem:[%s0 + $0xfa] sm:$0xff]
  %v1059 = vld [vmem:[%s0 + $0x102] sm:$0xff]
  %v1060 = vld [vmem:[%s0 + $0x10a] sm:$0xff]
  %v1061 = vld [vmem:[%s0 + $0x112] sm:$0xff]
  %v1062 = vld [vmem:[%s0 + $0x11a] sm:$0xff]
  %v1063 = vld [vmem:[%s0 + $0x122] sm:$0xff]
  %v1064 = vld [vmem:[%s0 + $0x12a] sm:$0xff]
  %v1065 = vld [vmem:[%s0 + $0x132] sm:$0xff]
  %v1066 = vld [vmem:[%s0 + $0x13a] sm:$0xff]
  %v1067 = vld [vmem:[%s0 + $0x142] sm:$0xff]
  %v1068 = vld [vmem:[%s0 + $0x14a] sm:$0xff]
  %v1069 = vld [vmem:[%s0 + $0x152] sm:$0xff]
  %v1070 = vld [vmem:[%s0 + $0x15a] sm:$0xff]
  %v1071 = vld [vmem:[%s0 + $0x162] sm:$0xff]
  %v1072 = vpack.c.bf16 %v1033, %v1032
  %v1073 = vpack.c.bf16 %v1035, %v1034
  %v1074 = vpack.c.bf16 %v1037, %v1036
  %v1075 = vpack.c.bf16 %v1039, %v1038
  %v1076 = vpack.c.bf16 %v1041, %v1040
  %v1077 = vpack.c.bf16 %v1043, %v1042
  %v1078 = vpack.c.bf16 %v1045, %v1044
  %v1079 = vpack.c.bf16 %v1047, %v1046
  %v1080 = vpack.c.bf16 %v1049, %v1048
  %v1081 = vpack.c.bf16 %v1051, %v1050
  %v1082 = vpack.c.bf16 %v1053, %v1052
  %v1083 = vpack.c.bf16 %v1055, %v1054
  %v1084 = vpack.c.bf16 %v1057, %v1056
  %v1085 = vpack.c.bf16 %v1059, %v1058
  %v1086 = vpack.c.bf16 %v1061, %v1060
  %v1087 = vpack.c.bf16 %v1063, %v1062
  %v1088 = vpack.c.bf16 %v1065, %v1064
  %v1089 = vpack.c.bf16 %v1067, %v1066
  %v1090 = vpack.c.bf16 %v1069, %v1068
  %v1091 = vpack.c.bf16 %v1071, %v1070
  %s1092 = scalar_lea.vmem %s1, 8
  %v1093 = vld [vmem:[%s1092] sm:$0x3]
  %v1095 = vsel %vm138, %v1072, 0
  %v1098 = vsel %vm138, %v1073, 0
  %v1101 = vsel %vm138, %v1074, 0
  %v1104 = vsel %vm138, %v1075, 0
  %v1107 = vsel %vm138, %v1076, 0
  %v1110 = vsel %vm138, %v1077, 0
  %v1113 = vsel %vm138, %v1078, 0
  %v1116 = vsel %vm138, %v1079, 0
  %v1119 = vsel %vm138, %v1080, 0
  %v1122 = vsel %vm138, %v1081, 0
  %v1125 = vsel %vm138, %v1082, 0
  %v1128 = vsel %vm138, %v1083, 0
  %v1131 = vsel %vm138, %v1084, 0
  %v1134 = vsel %vm138, %v1085, 0
  %v1137 = vsel %vm138, %v1086, 0
  %v1140 = vsel %vm138, %v1087, 0
  %v1143 = vsel %vm138, %v1088, 0
  %v1146 = vsel %vm138, %v1089, 0
  %v1149 = vsel %vm138, %v1090, 0
  %v1152 = vsel %vm138, %v1091, 0
  %v1155 = vsel %vm199, %v1093, 0
  %1157 = vmatpush.bf16.msra.mxu0 0
  %1158 = vmatpush.bf16.msra.mxu0 0
  %1159 = vmatpush.bf16.msra.mxu0 0
  %1160 = vmatpush.bf16.msra.mxu0 0
  %1161 = vmatpush.bf16.msra.mxu0 0
  %1162 = vmatpush.bf16.msra.mxu0 0
  %1163 = vmatpush.bf16.msra.mxu0 0
  %1164 = vmatpush.bf16.msra.mxu0 %v1155
  %1165 = vmatmul.bf16.gmra.mxu0 %v1095
  %v1166 = vpop.f32.mrf.mxu0
  %v1167 = vadd.f32 0.0, %v1166
  %v1168 = vpop.f32.mrf.mxu0
  %v1169 = vadd.f32 0.0, %v1168
  %1170 = vmatmul.bf16.gmra.mxu0 %v1098
  %v1171 = vpop.f32.mrf.mxu0
  %v1172 = vadd.f32 0.0, %v1171
  %v1173 = vpop.f32.mrf.mxu0
  %v1174 = vadd.f32 0.0, %v1173
  %1175 = vmatmul.bf16.gmra.mxu0 %v1101
  %v1176 = vpop.f32.mrf.mxu0
  %v1177 = vadd.f32 0.0, %v1176
  %v1178 = vpop.f32.mrf.mxu0
  %v1179 = vadd.f32 0.0, %v1178
  %1180 = vmatmul.bf16.gmra.mxu0 %v1104
  %v1181 = vpop.f32.mrf.mxu0
  %v1182 = vadd.f32 0.0, %v1181
  %v1183 = vpop.f32.mrf.mxu0
  %v1184 = vadd.f32 0.0, %v1183
  %1185 = vmatmul.bf16.gmra.mxu0 %v1107
  %v1186 = vpop.f32.mrf.mxu0
  %v1187 = vadd.f32 0.0, %v1186
  %v1188 = vpop.f32.mrf.mxu0
  %v1189 = vadd.f32 0.0, %v1188
  %1190 = vmatmul.bf16.gmra.mxu0 %v1110
  %v1191 = vpop.f32.mrf.mxu0
  %v1192 = vadd.f32 0.0, %v1191
  %v1193 = vpop.f32.mrf.mxu0
  %v1194 = vadd.f32 0.0, %v1193
  %1195 = vmatmul.bf16.gmra.mxu0 %v1113
  %v1196 = vpop.f32.mrf.mxu0
  %v1197 = vadd.f32 0.0, %v1196
  %v1198 = vpop.f32.mrf.mxu0
  %v1199 = vadd.f32 0.0, %v1198
  %1200 = vmatmul.bf16.gmra.mxu0 %v1116
  %v1201 = vpop.f32.mrf.mxu0
  %v1202 = vadd.f32 0.0, %v1201
  %v1203 = vpop.f32.mrf.mxu0
  %v1204 = vadd.f32 0.0, %v1203
  %1205 = vmatmul.bf16.gmra.mxu0 %v1119
  %v1206 = vpop.f32.mrf.mxu0
  %v1207 = vadd.f32 0.0, %v1206
  %v1208 = vpop.f32.mrf.mxu0
  %v1209 = vadd.f32 0.0, %v1208
  %1210 = vmatmul.bf16.gmra.mxu0 %v1122
  %v1211 = vpop.f32.mrf.mxu0
  %v1212 = vadd.f32 0.0, %v1211
  %v1213 = vpop.f32.mrf.mxu0
  %v1214 = vadd.f32 0.0, %v1213
  %1215 = vmatmul.bf16.gmra.mxu0 %v1125
  %v1216 = vpop.f32.mrf.mxu0
  %v1217 = vadd.f32 0.0, %v1216
  %v1218 = vpop.f32.mrf.mxu0
  %v1219 = vadd.f32 0.0, %v1218
  %1220 = vmatmul.bf16.gmra.mxu0 %v1128
  %v1221 = vpop.f32.mrf.mxu0
  %v1222 = vadd.f32 0.0, %v1221
  %v1223 = vpop.f32.mrf.mxu0
  %v1224 = vadd.f32 0.0, %v1223
  %1225 = vmatmul.bf16.gmra.mxu0 %v1131
  %v1226 = vpop.f32.mrf.mxu0
  %v1227 = vadd.f32 0.0, %v1226
  %v1228 = vpop.f32.mrf.mxu0
  %v1229 = vadd.f32 0.0, %v1228
  %1230 = vmatmul.bf16.gmra.mxu0 %v1134
  %v1231 = vpop.f32.mrf.mxu0
  %v1232 = vadd.f32 0.0, %v1231
  %v1233 = vpop.f32.mrf.mxu0
  %v1234 = vadd.f32 0.0, %v1233
  %1235 = vmatmul.bf16.gmra.mxu0 %v1137
  %v1236 = vpop.f32.mrf.mxu0
  %v1237 = vadd.f32 0.0, %v1236
  %v1238 = vpop.f32.mrf.mxu0
  %v1239 = vadd.f32 0.0, %v1238
  %1240 = vmatmul.bf16.gmra.mxu0 %v1140
  %v1241 = vpop.f32.mrf.mxu0
  %v1242 = vadd.f32 0.0, %v1241
  %v1243 = vpop.f32.mrf.mxu0
  %v1244 = vadd.f32 0.0, %v1243
  %1245 = vmatmul.bf16.gmra.mxu0 %v1143
  %v1246 = vpop.f32.mrf.mxu0
  %v1247 = vadd.f32 0.0, %v1246
  %v1248 = vpop.f32.mrf.mxu0
  %v1249 = vadd.f32 0.0, %v1248
  %1250 = vmatmul.bf16.gmra.mxu0 %v1146
  %v1251 = vpop.f32.mrf.mxu0
  %v1252 = vadd.f32 0.0, %v1251
  %v1253 = vpop.f32.mrf.mxu0
  %v1254 = vadd.f32 0.0, %v1253
  %1255 = vmatmul.bf16.gmra.mxu0 %v1149
  %v1256 = vpop.f32.mrf.mxu0
  %v1257 = vadd.f32 0.0, %v1256
  %v1258 = vpop.f32.mrf.mxu0
  %v1259 = vadd.f32 0.0, %v1258
  %1260 = vmatmul.bf16.gmra.mxu0 %v1152
  %v1261 = vpop.f32.mrf.mxu0
  %v1262 = vadd.f32 0.0, %v1261
  %v1263 = vpop.f32.mrf.mxu0
  %v1264 = vadd.f32 0.0, %v1263
  %1265 = vdwg.mxu0
  %v1266 = vadd.f32 %v992, %v1167
  %v1267 = vadd.f32 %v993, %v1169
  %v1268 = vadd.f32 %v994, %v1172
  %v1269 = vadd.f32 %v995, %v1174
  %v1270 = vadd.f32 %v996, %v1177
  %v1271 = vadd.f32 %v997, %v1179
  %v1272 = vadd.f32 %v998, %v1182
  %v1273 = vadd.f32 %v999, %v1184
  %v1274 = vadd.f32 %v1000, %v1187
  %v1275 = vadd.f32 %v1001, %v1189
  %v1276 = vadd.f32 %v1002, %v1192
  %v1277 = vadd.f32 %v1003, %v1194
  %v1278 = vadd.f32 %v1004, %v1197
  %v1279 = vadd.f32 %v1005, %v1199
  %v1280 = vadd.f32 %v1006, %v1202
  %v1281 = vadd.f32 %v1007, %v1204
  %v1282 = vadd.f32 %v1008, %v1207
  %v1283 = vadd.f32 %v1009, %v1209
  %v1284 = vadd.f32 %v1010, %v1212
  %v1285 = vadd.f32 %v1011, %v1214
  %v1286 = vadd.f32 %v1012, %v1217
  %v1287 = vadd.f32 %v1013, %v1219
  %v1288 = vadd.f32 %v1014, %v1222
  %v1289 = vadd.f32 %v1015, %v1224
  %v1290 = vadd.f32 %v1016, %v1227
  %v1291 = vadd.f32 %v1017, %v1229
  %v1292 = vadd.f32 %v1018, %v1232
  %v1293 = vadd.f32 %v1019, %v1234
  %v1294 = vadd.f32 %v1020, %v1237
  %v1295 = vadd.f32 %v1021, %v1239
  %v1296 = vadd.f32 %v1022, %v1242
  %v1297 = vadd.f32 %v1023, %v1244
  %v1298 = vadd.f32 %v1024, %v1247
  %v1299 = vadd.f32 %v1025, %v1249
  %v1300 = vadd.f32 %v1026, %v1252
  %v1301 = vadd.f32 %v1027, %v1254
  %v1302 = vadd.f32 %v1028, %v1257
  %v1303 = vadd.f32 %v1029, %v1259
  %v1304 = vadd.f32 %v1030, %v1262
  %v1305 = vadd.f32 %v1031, %v1264
  %v1306 = vld [vmem:[%s0 + $0x2c] sm:$0xff]
  %v1307 = vld [vmem:[%s0 + $0x34] sm:$0xff]
  %v1308 = vld [vmem:[%s0 + $0x3c] sm:$0xff]
  %v1309 = vld [vmem:[%s0 + $0x44] sm:$0xff]
  %v1310 = vld [vmem:[%s0 + $0x4c] sm:$0xff]
  %v1311 = vld [vmem:[%s0 + $0x54] sm:$0xff]
  %v1312 = vld [vmem:[%s0 + $0x5c] sm:$0xff]
  %v1313 = vld [vmem:[%s0 + $0x64] sm:$0xff]
  %v1314 = vld [vmem:[%s0 + $0x6c] sm:$0xff]
  %v1315 = vld [vmem:[%s0 + $0x74] sm:$0xff]
  %v1316 = vld [vmem:[%s0 + $0x7c] sm:$0xff]
  %v1317 = vld [vmem:[%s0 + $0x84] sm:$0xff]
  %v1318 = vld [vmem:[%s0 + $0x8c] sm:$0xff]
  %v1319 = vld [vmem:[%s0 + $0x94] sm:$0xff]
  %v1320 = vld [vmem:[%s0 + $0x9c] sm:$0xff]
  %v1321 = vld [vmem:[%s0 + $0xa4] sm:$0xff]
  %v1322 = vld [vmem:[%s0 + $0xac] sm:$0xff]
  %v1323 = vld [vmem:[%s0 + $0xb4] sm:$0xff]
  %v1324 = vld [vmem:[%s0 + $0xbc] sm:$0xff]
  %v1325 = vld [vmem:[%s0 + $0xc4] sm:$0xff]
  %v1326 = vld [vmem:[%s0 + $0xcc] sm:$0xff]
  %v1327 = vld [vmem:[%s0 + $0xd4] sm:$0xff]
  %v1328 = vld [vmem:[%s0 + $0xdc] sm:$0xff]
  %v1329 = vld [vmem:[%s0 + $0xe4] sm:$0xff]
  %v1330 = vld [vmem:[%s0 + $0xec] sm:$0xff]
  %v1331 = vld [vmem:[%s0 + $0xf4] sm:$0xff]
  %v1332 = vld [vmem:[%s0 + $0xfc] sm:$0xff]
  %v1333 = vld [vmem:[%s0 + $0x104] sm:$0xff]
  %v1334 = vld [vmem:[%s0 + $0x10c] sm:$0xff]
  %v1335 = vld [vmem:[%s0 + $0x114] sm:$0xff]
  %v1336 = vld [vmem:[%s0 + $0x11c] sm:$0xff]
  %v1337 = vld [vmem:[%s0 + $0x124] sm:$0xff]
  %v1338 = vld [vmem:[%s0 + $0x12c] sm:$0xff]
  %v1339 = vld [vmem:[%s0 + $0x134] sm:$0xff]
  %v1340 = vld [vmem:[%s0 + $0x13c] sm:$0xff]
  %v1341 = vld [vmem:[%s0 + $0x144] sm:$0xff]
  %v1342 = vld [vmem:[%s0 + $0x14c] sm:$0xff]
  %v1343 = vld [vmem:[%s0 + $0x154] sm:$0xff]
  %v1344 = vld [vmem:[%s0 + $0x15c] sm:$0xff]
  %v1345 = vld [vmem:[%s0 + $0x164] sm:$0xff]
  %v1346 = vpack.c.bf16 %v1307, %v1306
  %v1347 = vpack.c.bf16 %v1309, %v1308
  %v1348 = vpack.c.bf16 %v1311, %v1310
  %v1349 = vpack.c.bf16 %v1313, %v1312
  %v1350 = vpack.c.bf16 %v1315, %v1314
  %v1351 = vpack.c.bf16 %v1317, %v1316
  %v1352 = vpack.c.bf16 %v1319, %v1318
  %v1353 = vpack.c.bf16 %v1321, %v1320
  %v1354 = vpack.c.bf16 %v1323, %v1322
  %v1355 = vpack.c.bf16 %v1325, %v1324
  %v1356 = vpack.c.bf16 %v1327, %v1326
  %v1357 = vpack.c.bf16 %v1329, %v1328
  %v1358 = vpack.c.bf16 %v1331, %v1330
  %v1359 = vpack.c.bf16 %v1333, %v1332
  %v1360 = vpack.c.bf16 %v1335, %v1334
  %v1361 = vpack.c.bf16 %v1337, %v1336
  %v1362 = vpack.c.bf16 %v1339, %v1338
  %v1363 = vpack.c.bf16 %v1341, %v1340
  %v1364 = vpack.c.bf16 %v1343, %v1342
  %v1365 = vpack.c.bf16 %v1345, %v1344
  %s1366 = scalar_lea.vmem %s1, 10
  %v1367 = vld [vmem:[%s1366] sm:$0x3]
  %v1369 = vsel %vm138, %v1346, 0
  %v1372 = vsel %vm138, %v1347, 0
  %v1375 = vsel %vm138, %v1348, 0
  %v1378 = vsel %vm138, %v1349, 0
  %v1381 = vsel %vm138, %v1350, 0
  %v1384 = vsel %vm138, %v1351, 0
  %v1387 = vsel %vm138, %v1352, 0
  %v1390 = vsel %vm138, %v1353, 0
  %v1393 = vsel %vm138, %v1354, 0
  %v1396 = vsel %vm138, %v1355, 0
  %v1399 = vsel %vm138, %v1356, 0
  %v1402 = vsel %vm138, %v1357, 0
  %v1405 = vsel %vm138, %v1358, 0
  %v1408 = vsel %vm138, %v1359, 0
  %v1411 = vsel %vm138, %v1360, 0
  %v1414 = vsel %vm138, %v1361, 0
  %v1417 = vsel %vm138, %v1362, 0
  %v1420 = vsel %vm138, %v1363, 0
  %v1423 = vsel %vm138, %v1364, 0
  %v1426 = vsel %vm138, %v1365, 0
  %v1429 = vsel %vm199, %v1367, 0
  %1431 = vmatpush.bf16.msra.mxu0 0
  %1432 = vmatpush.bf16.msra.mxu0 0
  %1433 = vmatpush.bf16.msra.mxu0 0
  %1434 = vmatpush.bf16.msra.mxu0 0
  %1435 = vmatpush.bf16.msra.mxu0 0
  %1436 = vmatpush.bf16.msra.mxu0 0
  %1437 = vmatpush.bf16.msra.mxu0 0
  %1438 = vmatpush.bf16.msra.mxu0 %v1429
  %1439 = vmatmul.bf16.gmra.mxu0 %v1369
  %v1440 = vpop.f32.mrf.mxu0
  %v1441 = vadd.f32 0.0, %v1440
  %v1442 = vpop.f32.mrf.mxu0
  %v1443 = vadd.f32 0.0, %v1442
  %1444 = vmatmul.bf16.gmra.mxu0 %v1372
  %v1445 = vpop.f32.mrf.mxu0
  %v1446 = vadd.f32 0.0, %v1445
  %v1447 = vpop.f32.mrf.mxu0
  %v1448 = vadd.f32 0.0, %v1447
  %1449 = vmatmul.bf16.gmra.mxu0 %v1375
  %v1450 = vpop.f32.mrf.mxu0
  %v1451 = vadd.f32 0.0, %v1450
  %v1452 = vpop.f32.mrf.mxu0
  %v1453 = vadd.f32 0.0, %v1452
  %1454 = vmatmul.bf16.gmra.mxu0 %v1378
  %v1455 = vpop.f32.mrf.mxu0
  %v1456 = vadd.f32 0.0, %v1455
  %v1457 = vpop.f32.mrf.mxu0
  %v1458 = vadd.f32 0.0, %v1457
  %1459 = vmatmul.bf16.gmra.mxu0 %v1381
  %v1460 = vpop.f32.mrf.mxu0
  %v1461 = vadd.f32 0.0, %v1460
  %v1462 = vpop.f32.mrf.mxu0
  %v1463 = vadd.f32 0.0, %v1462
  %1464 = vmatmul.bf16.gmra.mxu0 %v1384
  %v1465 = vpop.f32.mrf.mxu0
  %v1466 = vadd.f32 0.0, %v1465
  %v1467 = vpop.f32.mrf.mxu0
  %v1468 = vadd.f32 0.0, %v1467
  %1469 = vmatmul.bf16.gmra.mxu0 %v1387
  %v1470 = vpop.f32.mrf.mxu0
  %v1471 = vadd.f32 0.0, %v1470
  %v1472 = vpop.f32.mrf.mxu0
  %v1473 = vadd.f32 0.0, %v1472
  %1474 = vmatmul.bf16.gmra.mxu0 %v1390
  %v1475 = vpop.f32.mrf.mxu0
  %v1476 = vadd.f32 0.0, %v1475
  %v1477 = vpop.f32.mrf.mxu0
  %v1478 = vadd.f32 0.0, %v1477
  %1479 = vmatmul.bf16.gmra.mxu0 %v1393
  %v1480 = vpop.f32.mrf.mxu0
  %v1481 = vadd.f32 0.0, %v1480
  %v1482 = vpop.f32.mrf.mxu0
  %v1483 = vadd.f32 0.0, %v1482
  %1484 = vmatmul.bf16.gmra.mxu0 %v1396
  %v1485 = vpop.f32.mrf.mxu0
  %v1486 = vadd.f32 0.0, %v1485
  %v1487 = vpop.f32.mrf.mxu0
  %v1488 = vadd.f32 0.0, %v1487
  %1489 = vmatmul.bf16.gmra.mxu0 %v1399
  %v1490 = vpop.f32.mrf.mxu0
  %v1491 = vadd.f32 0.0, %v1490
  %v1492 = vpop.f32.mrf.mxu0
  %v1493 = vadd.f32 0.0, %v1492
  %1494 = vmatmul.bf16.gmra.mxu0 %v1402
  %v1495 = vpop.f32.mrf.mxu0
  %v1496 = vadd.f32 0.0, %v1495
  %v1497 = vpop.f32.mrf.mxu0
  %v1498 = vadd.f32 0.0, %v1497
  %1499 = vmatmul.bf16.gmra.mxu0 %v1405
  %v1500 = vpop.f32.mrf.mxu0
  %v1501 = vadd.f32 0.0, %v1500
  %v1502 = vpop.f32.mrf.mxu0
  %v1503 = vadd.f32 0.0, %v1502
  %1504 = vmatmul.bf16.gmra.mxu0 %v1408
  %v1505 = vpop.f32.mrf.mxu0
  %v1506 = vadd.f32 0.0, %v1505
  %v1507 = vpop.f32.mrf.mxu0
  %v1508 = vadd.f32 0.0, %v1507
  %1509 = vmatmul.bf16.gmra.mxu0 %v1411
  %v1510 = vpop.f32.mrf.mxu0
  %v1511 = vadd.f32 0.0, %v1510
  %v1512 = vpop.f32.mrf.mxu0
  %v1513 = vadd.f32 0.0, %v1512
  %1514 = vmatmul.bf16.gmra.mxu0 %v1414
  %v1515 = vpop.f32.mrf.mxu0
  %v1516 = vadd.f32 0.0, %v1515
  %v1517 = vpop.f32.mrf.mxu0
  %v1518 = vadd.f32 0.0, %v1517
  %1519 = vmatmul.bf16.gmra.mxu0 %v1417
  %v1520 = vpop.f32.mrf.mxu0
  %v1521 = vadd.f32 0.0, %v1520
  %v1522 = vpop.f32.mrf.mxu0
  %v1523 = vadd.f32 0.0, %v1522
  %1524 = vmatmul.bf16.gmra.mxu0 %v1420
  %v1525 = vpop.f32.mrf.mxu0
  %v1526 = vadd.f32 0.0, %v1525
  %v1527 = vpop.f32.mrf.mxu0
  %v1528 = vadd.f32 0.0, %v1527
  %1529 = vmatmul.bf16.gmra.mxu0 %v1423
  %v1530 = vpop.f32.mrf.mxu0
  %v1531 = vadd.f32 0.0, %v1530
  %v1532 = vpop.f32.mrf.mxu0
  %v1533 = vadd.f32 0.0, %v1532
  %1534 = vmatmul.bf16.gmra.mxu0 %v1426
  %v1535 = vpop.f32.mrf.mxu0
  %v1536 = vadd.f32 0.0, %v1535
  %v1537 = vpop.f32.mrf.mxu0
  %v1538 = vadd.f32 0.0, %v1537
  %1539 = vdwg.mxu0
  %v1540 = vadd.f32 %v1266, %v1441
  %v1541 = vadd.f32 %v1267, %v1443
  %v1542 = vadd.f32 %v1268, %v1446
  %v1543 = vadd.f32 %v1269, %v1448
  %v1544 = vadd.f32 %v1270, %v1451
  %v1545 = vadd.f32 %v1271, %v1453
  %v1546 = vadd.f32 %v1272, %v1456
  %v1547 = vadd.f32 %v1273, %v1458
  %v1548 = vadd.f32 %v1274, %v1461
  %v1549 = vadd.f32 %v1275, %v1463
  %v1550 = vadd.f32 %v1276, %v1466
  %v1551 = vadd.f32 %v1277, %v1468
  %v1552 = vadd.f32 %v1278, %v1471
  %v1553 = vadd.f32 %v1279, %v1473
  %v1554 = vadd.f32 %v1280, %v1476
  %v1555 = vadd.f32 %v1281, %v1478
  %v1556 = vadd.f32 %v1282, %v1481
  %v1557 = vadd.f32 %v1283, %v1483
  %v1558 = vadd.f32 %v1284, %v1486
  %v1559 = vadd.f32 %v1285, %v1488
  %v1560 = vadd.f32 %v1286, %v1491
  %v1561 = vadd.f32 %v1287, %v1493
  %v1562 = vadd.f32 %v1288, %v1496
  %v1563 = vadd.f32 %v1289, %v1498
  %v1564 = vadd.f32 %v1290, %v1501
  %v1565 = vadd.f32 %v1291, %v1503
  %v1566 = vadd.f32 %v1292, %v1506
  %v1567 = vadd.f32 %v1293, %v1508
  %v1568 = vadd.f32 %v1294, %v1511
  %v1569 = vadd.f32 %v1295, %v1513
  %v1570 = vadd.f32 %v1296, %v1516
  %v1571 = vadd.f32 %v1297, %v1518
  %v1572 = vadd.f32 %v1298, %v1521
  %v1573 = vadd.f32 %v1299, %v1523
  %v1574 = vadd.f32 %v1300, %v1526
  %v1575 = vadd.f32 %v1301, %v1528
  %v1576 = vadd.f32 %v1302, %v1531
  %v1577 = vadd.f32 %v1303, %v1533
  %v1578 = vadd.f32 %v1304, %v1536
  %v1579 = vadd.f32 %v1305, %v1538
  %v1580 = vld [vmem:[%s0 + $0x50] sm:$0xff]
  %v1581 = vld [vmem:[%s0 + $0x58] sm:$0xff]
  %v1582 = vld [vmem:[%s0 + $0x60] sm:$0xff]
  %v1583 = vld [vmem:[%s0 + $0x68] sm:$0xff]
  %v1584 = vld [vmem:[%s0 + $0x70] sm:$0xff]
  %v1585 = vld [vmem:[%s0 + $0x78] sm:$0xff]
  %v1586 = vld [vmem:[%s0 + $0x80] sm:$0xff]
  %v1587 = vld [vmem:[%s0 + $0x88] sm:$0xff]
  %v1588 = vld [vmem:[%s0 + $0x90] sm:$0xff]
  %v1589 = vld [vmem:[%s0 + $0x98] sm:$0xff]
  %v1590 = vld [vmem:[%s0 + $0xa0] sm:$0xff]
  %v1591 = vld [vmem:[%s0 + $0xa8] sm:$0xff]
  %v1592 = vld [vmem:[%s0 + $0xb0] sm:$0xff]
  %v1593 = vld [vmem:[%s0 + $0xb8] sm:$0xff]
  %v1594 = vld [vmem:[%s0 + $0xc0] sm:$0xff]
  %v1595 = vld [vmem:[%s0 + $0xc8] sm:$0xff]
  %v1596 = vld [vmem:[%s0 + $0xd0] sm:$0xff]
  %v1597 = vld [vmem:[%s0 + $0xd8] sm:$0xff]
  %v1598 = vld [vmem:[%s0 + $0xe0] sm:$0xff]
  %v1599 = vld [vmem:[%s0 + $0xe8] sm:$0xff]
  %v1600 = vld [vmem:[%s0 + $0xf0] sm:$0xff]
  %v1601 = vld [vmem:[%s0 + $0xf8] sm:$0xff]
  %v1602 = vld [vmem:[%s0 + $0x100] sm:$0xff]
  %v1603 = vld [vmem:[%s0 + $0x108] sm:$0xff]
  %v1604 = vld [vmem:[%s0 + $0x110] sm:$0xff]
  %v1605 = vld [vmem:[%s0 + $0x118] sm:$0xff]
  %v1606 = vld [vmem:[%s0 + $0x120] sm:$0xff]
  %v1607 = vld [vmem:[%s0 + $0x128] sm:$0xff]
  %v1608 = vld [vmem:[%s0 + $0x130] sm:$0xff]
  %v1609 = vld [vmem:[%s0 + $0x138] sm:$0xff]
  %v1610 = vld [vmem:[%s0 + $0x140] sm:$0xff]
  %v1611 = vld [vmem:[%s0 + $0x148] sm:$0xff]
  %v1612 = vld [vmem:[%s0 + $0x150] sm:$0xff]
  %v1613 = vld [vmem:[%s0 + $0x158] sm:$0xff]
  %v1614 = vld [vmem:[%s0 + $0x160] sm:$0xff]
  %v1615 = vld [vmem:[%s0 + $0x168] sm:$0xff]
  %v1616 = vld [vmem:[%s0 + $0x170] sm:$0xff]
  %v1617 = vld [vmem:[%s0 + $0x178] sm:$0xff]
  %v1618 = vld [vmem:[%s0 + $0x180] sm:$0xff]
  %v1619 = vld [vmem:[%s0 + $0x188] sm:$0xff]
  %v1620 = vpack.c.bf16 %v1581, %v1580
  %v1621 = vpack.c.bf16 %v1583, %v1582
  %v1622 = vpack.c.bf16 %v1585, %v1584
  %v1623 = vpack.c.bf16 %v1587, %v1586
  %v1624 = vpack.c.bf16 %v1589, %v1588
  %v1625 = vpack.c.bf16 %v1591, %v1590
  %v1626 = vpack.c.bf16 %v1593, %v1592
  %v1627 = vpack.c.bf16 %v1595, %v1594
  %v1628 = vpack.c.bf16 %v1597, %v1596
  %v1629 = vpack.c.bf16 %v1599, %v1598
  %v1630 = vpack.c.bf16 %v1601, %v1600
  %v1631 = vpack.c.bf16 %v1603, %v1602
  %v1632 = vpack.c.bf16 %v1605, %v1604
  %v1633 = vpack.c.bf16 %v1607, %v1606
  %v1634 = vpack.c.bf16 %v1609, %v1608
  %v1635 = vpack.c.bf16 %v1611, %v1610
  %v1636 = vpack.c.bf16 %v1613, %v1612
  %v1637 = vpack.c.bf16 %v1615, %v1614
  %v1638 = vpack.c.bf16 %v1617, %v1616
  %v1639 = vpack.c.bf16 %v1619, %v1618
  %s1640 = scalar_lea.vmem %s1, 12
  %v1641 = vld [vmem:[%s1640] sm:$0x3]
  %v1643 = vsel %vm138, %v1620, 0
  %v1646 = vsel %vm138, %v1621, 0
  %v1649 = vsel %vm138, %v1622, 0
  %v1652 = vsel %vm138, %v1623, 0
  %v1655 = vsel %vm138, %v1624, 0
  %v1658 = vsel %vm138, %v1625, 0
  %v1661 = vsel %vm138, %v1626, 0
  %v1664 = vsel %vm138, %v1627, 0
  %v1667 = vsel %vm138, %v1628, 0
  %v1670 = vsel %vm138, %v1629, 0
  %v1673 = vsel %vm138, %v1630, 0
  %v1676 = vsel %vm138, %v1631, 0
  %v1679 = vsel %vm138, %v1632, 0
  %v1682 = vsel %vm138, %v1633, 0
  %v1685 = vsel %vm138, %v1634, 0
  %v1688 = vsel %vm138, %v1635, 0
  %v1691 = vsel %vm138, %v1636, 0
  %v1694 = vsel %vm138, %v1637, 0
  %v1697 = vsel %vm138, %v1638, 0
  %v1700 = vsel %vm138, %v1639, 0
  %v1703 = vsel %vm199, %v1641, 0
  %1705 = vmatpush.bf16.msra.mxu0 0
  %1706 = vmatpush.bf16.msra.mxu0 0
  %1707 = vmatpush.bf16.msra.mxu0 0
  %1708 = vmatpush.bf16.msra.mxu0 0
  %1709 = vmatpush.bf16.msra.mxu0 0
  %1710 = vmatpush.bf16.msra.mxu0 0
  %1711 = vmatpush.bf16.msra.mxu0 0
  %1712 = vmatpush.bf16.msra.mxu0 %v1703
  %1713 = vmatmul.bf16.gmra.mxu0 %v1643
  %v1714 = vpop.f32.mrf.mxu0
  %v1715 = vadd.f32 0.0, %v1714
  %v1716 = vpop.f32.mrf.mxu0
  %v1717 = vadd.f32 0.0, %v1716
  %1718 = vmatmul.bf16.gmra.mxu0 %v1646
  %v1719 = vpop.f32.mrf.mxu0
  %v1720 = vadd.f32 0.0, %v1719
  %v1721 = vpop.f32.mrf.mxu0
  %v1722 = vadd.f32 0.0, %v1721
  %1723 = vmatmul.bf16.gmra.mxu0 %v1649
  %v1724 = vpop.f32.mrf.mxu0
  %v1725 = vadd.f32 0.0, %v1724
  %v1726 = vpop.f32.mrf.mxu0
  %v1727 = vadd.f32 0.0, %v1726
  %1728 = vmatmul.bf16.gmra.mxu0 %v1652
  %v1729 = vpop.f32.mrf.mxu0
  %v1730 = vadd.f32 0.0, %v1729
  %v1731 = vpop.f32.mrf.mxu0
  %v1732 = vadd.f32 0.0, %v1731
  %1733 = vmatmul.bf16.gmra.mxu0 %v1655
  %v1734 = vpop.f32.mrf.mxu0
  %v1735 = vadd.f32 0.0, %v1734
  %v1736 = vpop.f32.mrf.mxu0
  %v1737 = vadd.f32 0.0, %v1736
  %1738 = vmatmul.bf16.gmra.mxu0 %v1658
  %v1739 = vpop.f32.mrf.mxu0
  %v1740 = vadd.f32 0.0, %v1739
  %v1741 = vpop.f32.mrf.mxu0
  %v1742 = vadd.f32 0.0, %v1741
  %1743 = vmatmul.bf16.gmra.mxu0 %v1661
  %v1744 = vpop.f32.mrf.mxu0
  %v1745 = vadd.f32 0.0, %v1744
  %v1746 = vpop.f32.mrf.mxu0
  %v1747 = vadd.f32 0.0, %v1746
  %1748 = vmatmul.bf16.gmra.mxu0 %v1664
  %v1749 = vpop.f32.mrf.mxu0
  %v1750 = vadd.f32 0.0, %v1749
  %v1751 = vpop.f32.mrf.mxu0
  %v1752 = vadd.f32 0.0, %v1751
  %1753 = vmatmul.bf16.gmra.mxu0 %v1667
  %v1754 = vpop.f32.mrf.mxu0
  %v1755 = vadd.f32 0.0, %v1754
  %v1756 = vpop.f32.mrf.mxu0
  %v1757 = vadd.f32 0.0, %v1756
  %1758 = vmatmul.bf16.gmra.mxu0 %v1670
  %v1759 = vpop.f32.mrf.mxu0
  %v1760 = vadd.f32 0.0, %v1759
  %v1761 = vpop.f32.mrf.mxu0
  %v1762 = vadd.f32 0.0, %v1761
  %1763 = vmatmul.bf16.gmra.mxu0 %v1673
  %v1764 = vpop.f32.mrf.mxu0
  %v1765 = vadd.f32 0.0, %v1764
  %v1766 = vpop.f32.mrf.mxu0
  %v1767 = vadd.f32 0.0, %v1766
  %1768 = vmatmul.bf16.gmra.mxu0 %v1676
  %v1769 = vpop.f32.mrf.mxu0
  %v1770 = vadd.f32 0.0, %v1769
  %v1771 = vpop.f32.mrf.mxu0
  %v1772 = vadd.f32 0.0, %v1771
  %1773 = vmatmul.bf16.gmra.mxu0 %v1679
  %v1774 = vpop.f32.mrf.mxu0
  %v1775 = vadd.f32 0.0, %v1774
  %v1776 = vpop.f32.mrf.mxu0
  %v1777 = vadd.f32 0.0, %v1776
  %1778 = vmatmul.bf16.gmra.mxu0 %v1682
  %v1779 = vpop.f32.mrf.mxu0
  %v1780 = vadd.f32 0.0, %v1779
  %v1781 = vpop.f32.mrf.mxu0
  %v1782 = vadd.f32 0.0, %v1781
  %1783 = vmatmul.bf16.gmra.mxu0 %v1685
  %v1784 = vpop.f32.mrf.mxu0
  %v1785 = vadd.f32 0.0, %v1784
  %v1786 = vpop.f32.mrf.mxu0
  %v1787 = vadd.f32 0.0, %v1786
  %1788 = vmatmul.bf16.gmra.mxu0 %v1688
  %v1789 = vpop.f32.mrf.mxu0
  %v1790 = vadd.f32 0.0, %v1789
  %v1791 = vpop.f32.mrf.mxu0
  %v1792 = vadd.f32 0.0, %v1791
  %1793 = vmatmul.bf16.gmra.mxu0 %v1691
  %v1794 = vpop.f32.mrf.mxu0
  %v1795 = vadd.f32 0.0, %v1794
  %v1796 = vpop.f32.mrf.mxu0
  %v1797 = vadd.f32 0.0, %v1796
  %1798 = vmatmul.bf16.gmra.mxu0 %v1694
  %v1799 = vpop.f32.mrf.mxu0
  %v1800 = vadd.f32 0.0, %v1799
  %v1801 = vpop.f32.mrf.mxu0
  %v1802 = vadd.f32 0.0, %v1801
  %1803 = vmatmul.bf16.gmra.mxu0 %v1697
  %v1804 = vpop.f32.mrf.mxu0
  %v1805 = vadd.f32 0.0, %v1804
  %v1806 = vpop.f32.mrf.mxu0
  %v1807 = vadd.f32 0.0, %v1806
  %1808 = vmatmul.bf16.gmra.mxu0 %v1700
  %v1809 = vpop.f32.mrf.mxu0
  %v1810 = vadd.f32 0.0, %v1809
  %v1811 = vpop.f32.mrf.mxu0
  %v1812 = vadd.f32 0.0, %v1811
  %1813 = vdwg.mxu0
  %v1814 = vadd.f32 %v1540, %v1715
  %v1815 = vadd.f32 %v1541, %v1717
  %v1816 = vadd.f32 %v1542, %v1720
  %v1817 = vadd.f32 %v1543, %v1722
  %v1818 = vadd.f32 %v1544, %v1725
  %v1819 = vadd.f32 %v1545, %v1727
  %v1820 = vadd.f32 %v1546, %v1730
  %v1821 = vadd.f32 %v1547, %v1732
  %v1822 = vadd.f32 %v1548, %v1735
  %v1823 = vadd.f32 %v1549, %v1737
  %v1824 = vadd.f32 %v1550, %v1740
  %v1825 = vadd.f32 %v1551, %v1742
  %v1826 = vadd.f32 %v1552, %v1745
  %v1827 = vadd.f32 %v1553, %v1747
  %v1828 = vadd.f32 %v1554, %v1750
  %v1829 = vadd.f32 %v1555, %v1752
  %v1830 = vadd.f32 %v1556, %v1755
  %v1831 = vadd.f32 %v1557, %v1757
  %v1832 = vadd.f32 %v1558, %v1760
  %v1833 = vadd.f32 %v1559, %v1762
  %v1834 = vadd.f32 %v1560, %v1765
  %v1835 = vadd.f32 %v1561, %v1767
  %v1836 = vadd.f32 %v1562, %v1770
  %v1837 = vadd.f32 %v1563, %v1772
  %v1838 = vadd.f32 %v1564, %v1775
  %v1839 = vadd.f32 %v1565, %v1777
  %v1840 = vadd.f32 %v1566, %v1780
  %v1841 = vadd.f32 %v1567, %v1782
  %v1842 = vadd.f32 %v1568, %v1785
  %v1843 = vadd.f32 %v1569, %v1787
  %v1844 = vadd.f32 %v1570, %v1790
  %v1845 = vadd.f32 %v1571, %v1792
  %v1846 = vadd.f32 %v1572, %v1795
  %v1847 = vadd.f32 %v1573, %v1797
  %v1848 = vadd.f32 %v1574, %v1800
  %v1849 = vadd.f32 %v1575, %v1802
  %v1850 = vadd.f32 %v1576, %v1805
  %v1851 = vadd.f32 %v1577, %v1807
  %v1852 = vadd.f32 %v1578, %v1810
  %v1853 = vadd.f32 %v1579, %v1812
  %v1854 = vld [vmem:[%s0 + $0x52] sm:$0xff]
  %v1855 = vld [vmem:[%s0 + $0x5a] sm:$0xff]
  %v1856 = vld [vmem:[%s0 + $0x62] sm:$0xff]
  %v1857 = vld [vmem:[%s0 + $0x6a] sm:$0xff]
  %v1858 = vld [vmem:[%s0 + $0x72] sm:$0xff]
  %v1859 = vld [vmem:[%s0 + $0x7a] sm:$0xff]
  %v1860 = vld [vmem:[%s0 + $0x82] sm:$0xff]
  %v1861 = vld [vmem:[%s0 + $0x8a] sm:$0xff]
  %v1862 = vld [vmem:[%s0 + $0x92] sm:$0xff]
  %v1863 = vld [vmem:[%s0 + $0x9a] sm:$0xff]
  %v1864 = vld [vmem:[%s0 + $0xa2] sm:$0xff]
  %v1865 = vld [vmem:[%s0 + $0xaa] sm:$0xff]
  %v1866 = vld [vmem:[%s0 + $0xb2] sm:$0xff]
  %v1867 = vld [vmem:[%s0 + $0xba] sm:$0xff]
  %v1868 = vld [vmem:[%s0 + $0xc2] sm:$0xff]
  %v1869 = vld [vmem:[%s0 + $0xca] sm:$0xff]
  %v1870 = vld [vmem:[%s0 + $0xd2] sm:$0xff]
  %v1871 = vld [vmem:[%s0 + $0xda] sm:$0xff]
  %v1872 = vld [vmem:[%s0 + $0xe2] sm:$0xff]
  %v1873 = vld [vmem:[%s0 + $0xea] sm:$0xff]
  %v1874 = vld [vmem:[%s0 + $0xf2] sm:$0xff]
  %v1875 = vld [vmem:[%s0 + $0xfa] sm:$0xff]
  %v1876 = vld [vmem:[%s0 + $0x102] sm:$0xff]
  %v1877 = vld [vmem:[%s0 + $0x10a] sm:$0xff]
  %v1878 = vld [vmem:[%s0 + $0x112] sm:$0xff]
  %v1879 = vld [vmem:[%s0 + $0x11a] sm:$0xff]
  %v1880 = vld [vmem:[%s0 + $0x122] sm:$0xff]
  %v1881 = vld [vmem:[%s0 + $0x12a] sm:$0xff]
  %v1882 = vld [vmem:[%s0 + $0x132] sm:$0xff]
  %v1883 = vld [vmem:[%s0 + $0x13a] sm:$0xff]
  %v1884 = vld [vmem:[%s0 + $0x142] sm:$0xff]
  %v1885 = vld [vmem:[%s0 + $0x14a] sm:$0xff]
  %v1886 = vld [vmem:[%s0 + $0x152] sm:$0xff]
  %v1887 = vld [vmem:[%s0 + $0x15a] sm:$0xff]
  %v1888 = vld [vmem:[%s0 + $0x162] sm:$0xff]
  %v1889 = vld [vmem:[%s0 + $0x16a] sm:$0xff]
  %v1890 = vld [vmem:[%s0 + $0x172] sm:$0xff]
  %v1891 = vld [vmem:[%s0 + $0x17a] sm:$0xff]
  %v1892 = vld [vmem:[%s0 + $0x182] sm:$0xff]
  %v1893 = vld [vmem:[%s0 + $0x18a] sm:$0xff]
  %v1894 = vpack.c.bf16 %v1855, %v1854
  %v1895 = vpack.c.bf16 %v1857, %v1856
  %v1896 = vpack.c.bf16 %v1859, %v1858
  %v1897 = vpack.c.bf16 %v1861, %v1860
  %v1898 = vpack.c.bf16 %v1863, %v1862
  %v1899 = vpack.c.bf16 %v1865, %v1864
  %v1900 = vpack.c.bf16 %v1867, %v1866
  %v1901 = vpack.c.bf16 %v1869, %v1868
  %v1902 = vpack.c.bf16 %v1871, %v1870
  %v1903 = vpack.c.bf16 %v1873, %v1872
  %v1904 = vpack.c.bf16 %v1875, %v1874
  %v1905 = vpack.c.bf16 %v1877, %v1876
  %v1906 = vpack.c.bf16 %v1879, %v1878
  %v1907 = vpack.c.bf16 %v1881, %v1880
  %v1908 = vpack.c.bf16 %v1883, %v1882
  %v1909 = vpack.c.bf16 %v1885, %v1884
  %v1910 = vpack.c.bf16 %v1887, %v1886
  %v1911 = vpack.c.bf16 %v1889, %v1888
  %v1912 = vpack.c.bf16 %v1891, %v1890
  %v1913 = vpack.c.bf16 %v1893, %v1892
  %s1914 = scalar_lea.vmem %s1, 14
  %v1915 = vld [vmem:[%s1914] sm:$0x3]
  %v1917 = vsel %vm138, %v1894, 0
  %v1920 = vsel %vm138, %v1895, 0
  %v1923 = vsel %vm138, %v1896, 0
  %v1926 = vsel %vm138, %v1897, 0
  %v1929 = vsel %vm138, %v1898, 0
  %v1932 = vsel %vm138, %v1899, 0
  %v1935 = vsel %vm138, %v1900, 0
  %v1938 = vsel %vm138, %v1901, 0
  %v1941 = vsel %vm138, %v1902, 0
  %v1944 = vsel %vm138, %v1903, 0
  %v1947 = vsel %vm138, %v1904, 0
  %v1950 = vsel %vm138, %v1905, 0
  %v1953 = vsel %vm138, %v1906, 0
  %v1956 = vsel %vm138, %v1907, 0
  %v1959 = vsel %vm138, %v1908, 0
  %v1962 = vsel %vm138, %v1909, 0
  %v1965 = vsel %vm138, %v1910, 0
  %v1968 = vsel %vm138, %v1911, 0
  %v1971 = vsel %vm138, %v1912, 0
  %v1974 = vsel %vm138, %v1913, 0
  %v1977 = vsel %vm199, %v1915, 0
  %1979 = vmatpush.bf16.msra.mxu0 0
  %1980 = vmatpush.bf16.msra.mxu0 0
  %1981 = vmatpush.bf16.msra.mxu0 0
  %1982 = vmatpush.bf16.msra.mxu0 0
  %1983 = vmatpush.bf16.msra.mxu0 0
  %1984 = vmatpush.bf16.msra.mxu0 0
  %1985 = vmatpush.bf16.msra.mxu0 0
  %1986 = vmatpush.bf16.msra.mxu0 %v1977
  %1987 = vmatmul.bf16.gmra.mxu0 %v1917
  %v1988 = vpop.f32.mrf.mxu0
  %v1989 = vadd.f32 0.0, %v1988
  %v1990 = vpop.f32.mrf.mxu0
  %v1991 = vadd.f32 0.0, %v1990
  %1992 = vmatmul.bf16.gmra.mxu0 %v1920
  %v1993 = vpop.f32.mrf.mxu0
  %v1994 = vadd.f32 0.0, %v1993
  %v1995 = vpop.f32.mrf.mxu0
  %v1996 = vadd.f32 0.0, %v1995
  %1997 = vmatmul.bf16.gmra.mxu0 %v1923
  %v1998 = vpop.f32.mrf.mxu0
  %v1999 = vadd.f32 0.0, %v1998
  %v2000 = vpop.f32.mrf.mxu0
  %v2001 = vadd.f32 0.0, %v2000
  %2002 = vmatmul.bf16.gmra.mxu0 %v1926
  %v2003 = vpop.f32.mrf.mxu0
  %v2004 = vadd.f32 0.0, %v2003
  %v2005 = vpop.f32.mrf.mxu0
  %v2006 = vadd.f32 0.0, %v2005
  %2007 = vmatmul.bf16.gmra.mxu0 %v1929
  %v2008 = vpop.f32.mrf.mxu0
  %v2009 = vadd.f32 0.0, %v2008
  %v2010 = vpop.f32.mrf.mxu0
  %v2011 = vadd.f32 0.0, %v2010
  %2012 = vmatmul.bf16.gmra.mxu0 %v1932
  %v2013 = vpop.f32.mrf.mxu0
  %v2014 = vadd.f32 0.0, %v2013
  %v2015 = vpop.f32.mrf.mxu0
  %v2016 = vadd.f32 0.0, %v2015
  %2017 = vmatmul.bf16.gmra.mxu0 %v1935
  %v2018 = vpop.f32.mrf.mxu0
  %v2019 = vadd.f32 0.0, %v2018
  %v2020 = vpop.f32.mrf.mxu0
  %v2021 = vadd.f32 0.0, %v2020
  %2022 = vmatmul.bf16.gmra.mxu0 %v1938
  %v2023 = vpop.f32.mrf.mxu0
  %v2024 = vadd.f32 0.0, %v2023
  %v2025 = vpop.f32.mrf.mxu0
  %v2026 = vadd.f32 0.0, %v2025
  %2027 = vmatmul.bf16.gmra.mxu0 %v1941
  %v2028 = vpop.f32.mrf.mxu0
  %v2029 = vadd.f32 0.0, %v2028
  %v2030 = vpop.f32.mrf.mxu0
  %v2031 = vadd.f32 0.0, %v2030
  %2032 = vmatmul.bf16.gmra.mxu0 %v1944
  %v2033 = vpop.f32.mrf.mxu0
  %v2034 = vadd.f32 0.0, %v2033
  %v2035 = vpop.f32.mrf.mxu0
  %v2036 = vadd.f32 0.0, %v2035
  %2037 = vmatmul.bf16.gmra.mxu0 %v1947
  %v2038 = vpop.f32.mrf.mxu0
  %v2039 = vadd.f32 0.0, %v2038
  %v2040 = vpop.f32.mrf.mxu0
  %v2041 = vadd.f32 0.0, %v2040
  %2042 = vmatmul.bf16.gmra.mxu0 %v1950
  %v2043 = vpop.f32.mrf.mxu0
  %v2044 = vadd.f32 0.0, %v2043
  %v2045 = vpop.f32.mrf.mxu0
  %v2046 = vadd.f32 0.0, %v2045
  %2047 = vmatmul.bf16.gmra.mxu0 %v1953
  %v2048 = vpop.f32.mrf.mxu0
  %v2049 = vadd.f32 0.0, %v2048
  %v2050 = vpop.f32.mrf.mxu0
  %v2051 = vadd.f32 0.0, %v2050
  %2052 = vmatmul.bf16.gmra.mxu0 %v1956
  %v2053 = vpop.f32.mrf.mxu0
  %v2054 = vadd.f32 0.0, %v2053
  %v2055 = vpop.f32.mrf.mxu0
  %v2056 = vadd.f32 0.0, %v2055
  %2057 = vmatmul.bf16.gmra.mxu0 %v1959
  %v2058 = vpop.f32.mrf.mxu0
  %v2059 = vadd.f32 0.0, %v2058
  %v2060 = vpop.f32.mrf.mxu0
  %v2061 = vadd.f32 0.0, %v2060
  %2062 = vmatmul.bf16.gmra.mxu0 %v1962
  %v2063 = vpop.f32.mrf.mxu0
  %v2064 = vadd.f32 0.0, %v2063
  %v2065 = vpop.f32.mrf.mxu0
  %v2066 = vadd.f32 0.0, %v2065
  %2067 = vmatmul.bf16.gmra.mxu0 %v1965
  %v2068 = vpop.f32.mrf.mxu0
  %v2069 = vadd.f32 0.0, %v2068
  %v2070 = vpop.f32.mrf.mxu0
  %v2071 = vadd.f32 0.0, %v2070
  %2072 = vmatmul.bf16.gmra.mxu0 %v1968
  %v2073 = vpop.f32.mrf.mxu0
  %v2074 = vadd.f32 0.0, %v2073
  %v2075 = vpop.f32.mrf.mxu0
  %v2076 = vadd.f32 0.0, %v2075
  %2077 = vmatmul.bf16.gmra.mxu0 %v1971
  %v2078 = vpop.f32.mrf.mxu0
  %v2079 = vadd.f32 0.0, %v2078
  %v2080 = vpop.f32.mrf.mxu0
  %v2081 = vadd.f32 0.0, %v2080
  %2082 = vmatmul.bf16.gmra.mxu0 %v1974
  %v2083 = vpop.f32.mrf.mxu0
  %v2084 = vadd.f32 0.0, %v2083
  %v2085 = vpop.f32.mrf.mxu0
  %v2086 = vadd.f32 0.0, %v2085
  %2087 = vdwg.mxu0
  %v2088 = vadd.f32 %v1814, %v1989
  %v2089 = vadd.f32 %v1815, %v1991
  %v2090 = vadd.f32 %v1816, %v1994
  %v2091 = vadd.f32 %v1817, %v1996
  %v2092 = vadd.f32 %v1818, %v1999
  %v2093 = vadd.f32 %v1819, %v2001
  %v2094 = vadd.f32 %v1820, %v2004
  %v2095 = vadd.f32 %v1821, %v2006
  %v2096 = vadd.f32 %v1822, %v2009
  %v2097 = vadd.f32 %v1823, %v2011
  %v2098 = vadd.f32 %v1824, %v2014
  %v2099 = vadd.f32 %v1825, %v2016
  %v2100 = vadd.f32 %v1826, %v2019
  %v2101 = vadd.f32 %v1827, %v2021
  %v2102 = vadd.f32 %v1828, %v2024
  %v2103 = vadd.f32 %v1829, %v2026
  %v2104 = vadd.f32 %v1830, %v2029
  %v2105 = vadd.f32 %v1831, %v2031
  %v2106 = vadd.f32 %v1832, %v2034
  %v2107 = vadd.f32 %v1833, %v2036
  %v2108 = vadd.f32 %v1834, %v2039
  %v2109 = vadd.f32 %v1835, %v2041
  %v2110 = vadd.f32 %v1836, %v2044
  %v2111 = vadd.f32 %v1837, %v2046
  %v2112 = vadd.f32 %v1838, %v2049
  %v2113 = vadd.f32 %v1839, %v2051
  %v2114 = vadd.f32 %v1840, %v2054
  %v2115 = vadd.f32 %v1841, %v2056
  %v2116 = vadd.f32 %v1842, %v2059
  %v2117 = vadd.f32 %v1843, %v2061
  %v2118 = vadd.f32 %v1844, %v2064
  %v2119 = vadd.f32 %v1845, %v2066
  %v2120 = vadd.f32 %v1846, %v2069
  %v2121 = vadd.f32 %v1847, %v2071
  %v2122 = vadd.f32 %v1848, %v2074
  %v2123 = vadd.f32 %v1849, %v2076
  %v2124 = vadd.f32 %v1850, %v2079
  %v2125 = vadd.f32 %v1851, %v2081
  %v2126 = vadd.f32 %v1852, %v2084
  %v2127 = vadd.f32 %v1853, %v2086
  %v2128 = vld [vmem:[%s0 + $0x54] sm:$0xff]
  %v2129 = vld [vmem:[%s0 + $0x5c] sm:$0xff]
  %v2130 = vld [vmem:[%s0 + $0x64] sm:$0xff]
  %v2131 = vld [vmem:[%s0 + $0x6c] sm:$0xff]
  %v2132 = vld [vmem:[%s0 + $0x74] sm:$0xff]
  %v2133 = vld [vmem:[%s0 + $0x7c] sm:$0xff]
  %v2134 = vld [vmem:[%s0 + $0x84] sm:$0xff]
  %v2135 = vld [vmem:[%s0 + $0x8c] sm:$0xff]
  %v2136 = vld [vmem:[%s0 + $0x94] sm:$0xff]
  %v2137 = vld [vmem:[%s0 + $0x9c] sm:$0xff]
  %v2138 = vld [vmem:[%s0 + $0xa4] sm:$0xff]
  %v2139 = vld [vmem:[%s0 + $0xac] sm:$0xff]
  %v2140 = vld [vmem:[%s0 + $0xb4] sm:$0xff]
  %v2141 = vld [vmem:[%s0 + $0xbc] sm:$0xff]
  %v2142 = vld [vmem:[%s0 + $0xc4] sm:$0xff]
  %v2143 = vld [vmem:[%s0 + $0xcc] sm:$0xff]
  %v2144 = vld [vmem:[%s0 + $0xd4] sm:$0xff]
  %v2145 = vld [vmem:[%s0 + $0xdc] sm:$0xff]
  %v2146 = vld [vmem:[%s0 + $0xe4] sm:$0xff]
  %v2147 = vld [vmem:[%s0 + $0xec] sm:$0xff]
  %v2148 = vld [vmem:[%s0 + $0xf4] sm:$0xff]
  %v2149 = vld [vmem:[%s0 + $0xfc] sm:$0xff]
  %v2150 = vld [vmem:[%s0 + $0x104] sm:$0xff]
  %v2151 = vld [vmem:[%s0 + $0x10c] sm:$0xff]
  %v2152 = vld [vmem:[%s0 + $0x114] sm:$0xff]
  %v2153 = vld [vmem:[%s0 + $0x11c] sm:$0xff]
  %v2154 = vld [vmem:[%s0 + $0x124] sm:$0xff]
  %v2155 = vld [vmem:[%s0 + $0x12c] sm:$0xff]
  %v2156 = vld [vmem:[%s0 + $0x134] sm:$0xff]
  %v2157 = vld [vmem:[%s0 + $0x13c] sm:$0xff]
  %v2158 = vld [vmem:[%s0 + $0x144] sm:$0xff]
  %v2159 = vld [vmem:[%s0 + $0x14c] sm:$0xff]
  %v2160 = vld [vmem:[%s0 + $0x154] sm:$0xff]
  %v2161 = vld [vmem:[%s0 + $0x15c] sm:$0xff]
  %v2162 = vld [vmem:[%s0 + $0x164] sm:$0xff]
  %v2163 = vld [vmem:[%s0 + $0x16c] sm:$0xff]
  %v2164 = vld [vmem:[%s0 + $0x174] sm:$0xff]
  %v2165 = vld [vmem:[%s0 + $0x17c] sm:$0xff]
  %v2166 = vld [vmem:[%s0 + $0x184] sm:$0xff]
  %v2167 = vld [vmem:[%s0 + $0x18c] sm:$0xff]
  %v2168 = vpack.c.bf16 %v2129, %v2128
  %v2169 = vpack.c.bf16 %v2131, %v2130
  %v2170 = vpack.c.bf16 %v2133, %v2132
  %v2171 = vpack.c.bf16 %v2135, %v2134
  %v2172 = vpack.c.bf16 %v2137, %v2136
  %v2173 = vpack.c.bf16 %v2139, %v2138
  %v2174 = vpack.c.bf16 %v2141, %v2140
  %v2175 = vpack.c.bf16 %v2143, %v2142
  %v2176 = vpack.c.bf16 %v2145, %v2144
  %v2177 = vpack.c.bf16 %v2147, %v2146
  %v2178 = vpack.c.bf16 %v2149, %v2148
  %v2179 = vpack.c.bf16 %v2151, %v2150
  %v2180 = vpack.c.bf16 %v2153, %v2152
  %v2181 = vpack.c.bf16 %v2155, %v2154
  %v2182 = vpack.c.bf16 %v2157, %v2156
  %v2183 = vpack.c.bf16 %v2159, %v2158
  %v2184 = vpack.c.bf16 %v2161, %v2160
  %v2185 = vpack.c.bf16 %v2163, %v2162
  %v2186 = vpack.c.bf16 %v2165, %v2164
  %v2187 = vpack.c.bf16 %v2167, %v2166
  %s2188 = scalar_lea.vmem %s1, 16
  %v2189 = vld [vmem:[%s2188] sm:$0x3]
  %v2191 = vsel %vm138, %v2168, 0
  %v2194 = vsel %vm138, %v2169, 0
  %v2197 = vsel %vm138, %v2170, 0
  %v2200 = vsel %vm138, %v2171, 0
  %v2203 = vsel %vm138, %v2172, 0
  %v2206 = vsel %vm138, %v2173, 0
  %v2209 = vsel %vm138, %v2174, 0
  %v2212 = vsel %vm138, %v2175, 0
  %v2215 = vsel %vm138, %v2176, 0
  %v2218 = vsel %vm138, %v2177, 0
  %v2221 = vsel %vm138, %v2178, 0
  %v2224 = vsel %vm138, %v2179, 0
  %v2227 = vsel %vm138, %v2180, 0
  %v2230 = vsel %vm138, %v2181, 0
  %v2233 = vsel %vm138, %v2182, 0
  %v2236 = vsel %vm138, %v2183, 0
  %v2239 = vsel %vm138, %v2184, 0
  %v2242 = vsel %vm138, %v2185, 0
  %v2245 = vsel %vm138, %v2186, 0
  %v2248 = vsel %vm138, %v2187, 0
  %v2251 = vsel %vm199, %v2189, 0
  %2253 = vmatpush.bf16.msra.mxu0 0
  %2254 = vmatpush.bf16.msra.mxu0 0
  %2255 = vmatpush.bf16.msra.mxu0 0
  %2256 = vmatpush.bf16.msra.mxu0 0
  %2257 = vmatpush.bf16.msra.mxu0 0
  %2258 = vmatpush.bf16.msra.mxu0 0
  %2259 = vmatpush.bf16.msra.mxu0 0
  %2260 = vmatpush.bf16.msra.mxu0 %v2251
  %2261 = vmatmul.bf16.gmra.mxu0 %v2191
  %v2262 = vpop.f32.mrf.mxu0
  %v2263 = vadd.f32 0.0, %v2262
  %v2264 = vpop.f32.mrf.mxu0
  %v2265 = vadd.f32 0.0, %v2264
  %2266 = vmatmul.bf16.gmra.mxu0 %v2194
  %v2267 = vpop.f32.mrf.mxu0
  %v2268 = vadd.f32 0.0, %v2267
  %v2269 = vpop.f32.mrf.mxu0
  %v2270 = vadd.f32 0.0, %v2269
  %2271 = vmatmul.bf16.gmra.mxu0 %v2197
  %v2272 = vpop.f32.mrf.mxu0
  %v2273 = vadd.f32 0.0, %v2272
  %v2274 = vpop.f32.mrf.mxu0
  %v2275 = vadd.f32 0.0, %v2274
  %2276 = vmatmul.bf16.gmra.mxu0 %v2200
  %v2277 = vpop.f32.mrf.mxu0
  %v2278 = vadd.f32 0.0, %v2277
  %v2279 = vpop.f32.mrf.mxu0
  %v2280 = vadd.f32 0.0, %v2279
  %2281 = vmatmul.bf16.gmra.mxu0 %v2203
  %v2282 = vpop.f32.mrf.mxu0
  %v2283 = vadd.f32 0.0, %v2282
  %v2284 = vpop.f32.mrf.mxu0
  %v2285 = vadd.f32 0.0, %v2284
  %2286 = vmatmul.bf16.gmra.mxu0 %v2206
  %v2287 = vpop.f32.mrf.mxu0
  %v2288 = vadd.f32 0.0, %v2287
  %v2289 = vpop.f32.mrf.mxu0
  %v2290 = vadd.f32 0.0, %v2289
  %2291 = vmatmul.bf16.gmra.mxu0 %v2209
  %v2292 = vpop.f32.mrf.mxu0
  %v2293 = vadd.f32 0.0, %v2292
  %v2294 = vpop.f32.mrf.mxu0
  %v2295 = vadd.f32 0.0, %v2294
  %2296 = vmatmul.bf16.gmra.mxu0 %v2212
  %v2297 = vpop.f32.mrf.mxu0
  %v2298 = vadd.f32 0.0, %v2297
  %v2299 = vpop.f32.mrf.mxu0
  %v2300 = vadd.f32 0.0, %v2299
  %2301 = vmatmul.bf16.gmra.mxu0 %v2215
  %v2302 = vpop.f32.mrf.mxu0
  %v2303 = vadd.f32 0.0, %v2302
  %v2304 = vpop.f32.mrf.mxu0
  %v2305 = vadd.f32 0.0, %v2304
  %2306 = vmatmul.bf16.gmra.mxu0 %v2218
  %v2307 = vpop.f32.mrf.mxu0
  %v2308 = vadd.f32 0.0, %v2307
  %v2309 = vpop.f32.mrf.mxu0
  %v2310 = vadd.f32 0.0, %v2309
  %2311 = vmatmul.bf16.gmra.mxu0 %v2221
  %v2312 = vpop.f32.mrf.mxu0
  %v2313 = vadd.f32 0.0, %v2312
  %v2314 = vpop.f32.mrf.mxu0
  %v2315 = vadd.f32 0.0, %v2314
  %2316 = vmatmul.bf16.gmra.mxu0 %v2224
  %v2317 = vpop.f32.mrf.mxu0
  %v2318 = vadd.f32 0.0, %v2317
  %v2319 = vpop.f32.mrf.mxu0
  %v2320 = vadd.f32 0.0, %v2319
  %2321 = vmatmul.bf16.gmra.mxu0 %v2227
  %v2322 = vpop.f32.mrf.mxu0
  %v2323 = vadd.f32 0.0, %v2322
  %v2324 = vpop.f32.mrf.mxu0
  %v2325 = vadd.f32 0.0, %v2324
  %2326 = vmatmul.bf16.gmra.mxu0 %v2230
  %v2327 = vpop.f32.mrf.mxu0
  %v2328 = vadd.f32 0.0, %v2327
  %v2329 = vpop.f32.mrf.mxu0
  %v2330 = vadd.f32 0.0, %v2329
  %2331 = vmatmul.bf16.gmra.mxu0 %v2233
  %v2332 = vpop.f32.mrf.mxu0
  %v2333 = vadd.f32 0.0, %v2332
  %v2334 = vpop.f32.mrf.mxu0
  %v2335 = vadd.f32 0.0, %v2334
  %2336 = vmatmul.bf16.gmra.mxu0 %v2236
  %v2337 = vpop.f32.mrf.mxu0
  %v2338 = vadd.f32 0.0, %v2337
  %v2339 = vpop.f32.mrf.mxu0
  %v2340 = vadd.f32 0.0, %v2339
  %2341 = vmatmul.bf16.gmra.mxu0 %v2239
  %v2342 = vpop.f32.mrf.mxu0
  %v2343 = vadd.f32 0.0, %v2342
  %v2344 = vpop.f32.mrf.mxu0
  %v2345 = vadd.f32 0.0, %v2344
  %2346 = vmatmul.bf16.gmra.mxu0 %v2242
  %v2347 = vpop.f32.mrf.mxu0
  %v2348 = vadd.f32 0.0, %v2347
  %v2349 = vpop.f32.mrf.mxu0
  %v2350 = vadd.f32 0.0, %v2349
  %2351 = vmatmul.bf16.gmra.mxu0 %v2245
  %v2352 = vpop.f32.mrf.mxu0
  %v2353 = vadd.f32 0.0, %v2352
  %v2354 = vpop.f32.mrf.mxu0
  %v2355 = vadd.f32 0.0, %v2354
  %2356 = vmatmul.bf16.gmra.mxu0 %v2248
  %v2357 = vpop.f32.mrf.mxu0
  %v2358 = vadd.f32 0.0, %v2357
  %v2359 = vpop.f32.mrf.mxu0
  %v2360 = vadd.f32 0.0, %v2359
  %2361 = vdwg.mxu0
  %v2362 = vadd.f32 %v2088, %v2263
  %v2363 = vadd.f32 %v2089, %v2265
  %v2364 = vadd.f32 %v2090, %v2268
  %v2365 = vadd.f32 %v2091, %v2270
  %v2366 = vadd.f32 %v2092, %v2273
  %v2367 = vadd.f32 %v2093, %v2275
  %v2368 = vadd.f32 %v2094, %v2278
  %v2369 = vadd.f32 %v2095, %v2280
  %v2370 = vadd.f32 %v2096, %v2283
  %v2371 = vadd.f32 %v2097, %v2285
  %v2372 = vadd.f32 %v2098, %v2288
  %v2373 = vadd.f32 %v2099, %v2290
  %v2374 = vadd.f32 %v2100, %v2293
  %v2375 = vadd.f32 %v2101, %v2295
  %v2376 = vadd.f32 %v2102, %v2298
  %v2377 = vadd.f32 %v2103, %v2300
  %v2378 = vadd.f32 %v2104, %v2303
  %v2379 = vadd.f32 %v2105, %v2305
  %v2380 = vadd.f32 %v2106, %v2308
  %v2381 = vadd.f32 %v2107, %v2310
  %v2382 = vadd.f32 %v2108, %v2313
  %v2383 = vadd.f32 %v2109, %v2315
  %v2384 = vadd.f32 %v2110, %v2318
  %v2385 = vadd.f32 %v2111, %v2320
  %v2386 = vadd.f32 %v2112, %v2323
  %v2387 = vadd.f32 %v2113, %v2325
  %v2388 = vadd.f32 %v2114, %v2328
  %v2389 = vadd.f32 %v2115, %v2330
  %v2390 = vadd.f32 %v2116, %v2333
  %v2391 = vadd.f32 %v2117, %v2335
  %v2392 = vadd.f32 %v2118, %v2338
  %v2393 = vadd.f32 %v2119, %v2340
  %v2394 = vadd.f32 %v2120, %v2343
  %v2395 = vadd.f32 %v2121, %v2345
  %v2396 = vadd.f32 %v2122, %v2348
  %v2397 = vadd.f32 %v2123, %v2350
  %v2398 = vadd.f32 %v2124, %v2353
  %v2399 = vadd.f32 %v2125, %v2355
  %v2400 = vadd.f32 %v2126, %v2358
  %v2401 = vadd.f32 %v2127, %v2360
  %v2402 = vld [vmem:[%s2] sm:$0x1]
  %v2404 = vperm.slane %v2402, 0
  %v2406 = vadd.f32 %v2362, %v2404
  %v2407 = vadd.f32 %v2363, %v2404
  %v2408 = vadd.f32 %v2364, %v2404
  %v2409 = vadd.f32 %v2365, %v2404
  %v2410 = vadd.f32 %v2366, %v2404
  %v2411 = vadd.f32 %v2367, %v2404
  %v2412 = vadd.f32 %v2368, %v2404
  %v2413 = vadd.f32 %v2369, %v2404
  %v2414 = vadd.f32 %v2370, %v2404
  %v2415 = vadd.f32 %v2371, %v2404
  %v2416 = vadd.f32 %v2372, %v2404
  %v2417 = vadd.f32 %v2373, %v2404
  %v2418 = vadd.f32 %v2374, %v2404
  %v2419 = vadd.f32 %v2375, %v2404
  %v2420 = vadd.f32 %v2376, %v2404
  %v2421 = vadd.f32 %v2377, %v2404
  %v2422 = vadd.f32 %v2378, %v2404
  %v2423 = vadd.f32 %v2379, %v2404
  %v2424 = vadd.f32 %v2380, %v2404
  %v2425 = vadd.f32 %v2381, %v2404
  %v2426 = vadd.f32 %v2382, %v2404
  %v2427 = vadd.f32 %v2383, %v2404
  %v2428 = vadd.f32 %v2384, %v2404
  %v2429 = vadd.f32 %v2385, %v2404
  %v2430 = vadd.f32 %v2386, %v2404
  %v2431 = vadd.f32 %v2387, %v2404
  %v2432 = vadd.f32 %v2388, %v2404
  %v2433 = vadd.f32 %v2389, %v2404
  %v2434 = vadd.f32 %v2390, %v2404
  %v2435 = vadd.f32 %v2391, %v2404
  %v2436 = vadd.f32 %v2392, %v2404
  %v2437 = vadd.f32 %v2393, %v2404
  %v2438 = vadd.f32 %v2394, %v2404
  %v2439 = vadd.f32 %v2395, %v2404
  %v2440 = vadd.f32 %v2396, %v2404
  %v2441 = vadd.f32 %v2397, %v2404
  %v2442 = vadd.f32 %v2398, %v2404
  %v2443 = vadd.f32 %v2399, %v2404
  %v2444 = vadd.f32 %v2400, %v2404
  %v2445 = vadd.f32 %v2401, %v2404
  %vm2446 = vcmp.ge.f32.partialorder %v2406, 0.0
  %vm2447 = vcmp.ge.f32.partialorder %v2407, 0.0
  %vm2448 = vcmp.ge.f32.partialorder %v2408, 0.0
  %vm2449 = vcmp.ge.f32.partialorder %v2409, 0.0
  %vm2450 = vcmp.ge.f32.partialorder %v2410, 0.0
  %vm2451 = vcmp.ge.f32.partialorder %v2411, 0.0
  %vm2452 = vcmp.ge.f32.partialorder %v2412, 0.0
  %vm2453 = vcmp.ge.f32.partialorder %v2413, 0.0
  %vm2454 = vcmp.ge.f32.partialorder %v2414, 0.0
  %vm2455 = vcmp.ge.f32.partialorder %v2415, 0.0
  %vm2456 = vcmp.ge.f32.partialorder %v2416, 0.0
  %vm2457 = vcmp.ge.f32.partialorder %v2417, 0.0
  %vm2458 = vcmp.ge.f32.partialorder %v2418, 0.0
  %vm2459 = vcmp.ge.f32.partialorder %v2419, 0.0
  %vm2460 = vcmp.ge.f32.partialorder %v2420, 0.0
  %vm2461 = vcmp.ge.f32.partialorder %v2421, 0.0
  %vm2462 = vcmp.ge.f32.partialorder %v2422, 0.0
  %vm2463 = vcmp.ge.f32.partialorder %v2423, 0.0
  %vm2464 = vcmp.ge.f32.partialorder %v2424, 0.0
  %vm2465 = vcmp.ge.f32.partialorder %v2425, 0.0
  %vm2466 = vcmp.ge.f32.partialorder %v2426, 0.0
  %vm2467 = vcmp.ge.f32.partialorder %v2427, 0.0
  %vm2468 = vcmp.ge.f32.partialorder %v2428, 0.0
  %vm2469 = vcmp.ge.f32.partialorder %v2429, 0.0
  %vm2470 = vcmp.ge.f32.partialorder %v2430, 0.0
  %vm2471 = vcmp.ge.f32.partialorder %v2431, 0.0
  %vm2472 = vcmp.ge.f32.partialorder %v2432, 0.0
  %vm2473 = vcmp.ge.f32.partialorder %v2433, 0.0
  %vm2474 = vcmp.ge.f32.partialorder %v2434, 0.0
  %vm2475 = vcmp.ge.f32.partialorder %v2435, 0.0
  %vm2476 = vcmp.ge.f32.partialorder %v2436, 0.0
  %vm2477 = vcmp.ge.f32.partialorder %v2437, 0.0
  %vm2478 = vcmp.ge.f32.partialorder %v2438, 0.0
  %vm2479 = vcmp.ge.f32.partialorder %v2439, 0.0
  %vm2480 = vcmp.ge.f32.partialorder %v2440, 0.0
  %vm2481 = vcmp.ge.f32.partialorder %v2441, 0.0
  %vm2482 = vcmp.ge.f32.partialorder %v2442, 0.0
  %vm2483 = vcmp.ge.f32.partialorder %v2443, 0.0
  %vm2484 = vcmp.ge.f32.partialorder %v2444, 0.0
  %vm2485 = vcmp.ge.f32.partialorder %v2445, 0.0
  %v2486 = vmul.f32 %v2406, 0.2
  %v2487 = vmul.f32 %v2407, 0.2
  %v2488 = vmul.f32 %v2408, 0.2
  %v2489 = vmul.f32 %v2409, 0.2
  %v2490 = vmul.f32 %v2410, 0.2
  %v2491 = vmul.f32 %v2411, 0.2
  %v2492 = vmul.f32 %v2412, 0.2
  %v2493 = vmul.f32 %v2413, 0.2
  %v2494 = vmul.f32 %v2414, 0.2
  %v2495 = vmul.f32 %v2415, 0.2
  %v2496 = vmul.f32 %v2416, 0.2
  %v2497 = vmul.f32 %v2417, 0.2
  %v2498 = vmul.f32 %v2418, 0.2
  %v2499 = vmul.f32 %v2419, 0.2
  %v2500 = vmul.f32 %v2420, 0.2
  %v2501 = vmul.f32 %v2421, 0.2
  %v2502 = vmul.f32 %v2422, 0.2
  %v2503 = vmul.f32 %v2423, 0.2
  %v2504 = vmul.f32 %v2424, 0.2
  %v2505 = vmul.f32 %v2425, 0.2
  %v2506 = vmul.f32 %v2426, 0.2
  %v2507 = vmul.f32 %v2427, 0.2
  %v2508 = vmul.f32 %v2428, 0.2
  %v2509 = vmul.f32 %v2429, 0.2
  %v2510 = vmul.f32 %v2430, 0.2
  %v2511 = vmul.f32 %v2431, 0.2
  %v2512 = vmul.f32 %v2432, 0.2
  %v2513 = vmul.f32 %v2433, 0.2
  %v2514 = vmul.f32 %v2434, 0.2
  %v2515 = vmul.f32 %v2435, 0.2
  %v2516 = vmul.f32 %v2436, 0.2
  %v2517 = vmul.f32 %v2437, 0.2
  %v2518 = vmul.f32 %v2438, 0.2
  %v2519 = vmul.f32 %v2439, 0.2
  %v2520 = vmul.f32 %v2440, 0.2
  %v2521 = vmul.f32 %v2441, 0.2
  %v2522 = vmul.f32 %v2442, 0.2
  %v2523 = vmul.f32 %v2443, 0.2
  %v2524 = vmul.f32 %v2444, 0.2
  %v2525 = vmul.f32 %v2445, 0.2
  %v2526 = vsel %vm2446, %v2406, %v2486
  %v2527 = vsel %vm2447, %v2407, %v2487
  %v2528 = vsel %vm2448, %v2408, %v2488
  %v2529 = vsel %vm2449, %v2409, %v2489
  %v2530 = vsel %vm2450, %v2410, %v2490
  %v2531 = vsel %vm2451, %v2411, %v2491
  %v2532 = vsel %vm2452, %v2412, %v2492
  %v2533 = vsel %vm2453, %v2413, %v2493
  %v2534 = vsel %vm2454, %v2414, %v2494
  %v2535 = vsel %vm2455, %v2415, %v2495
  %v2536 = vsel %vm2456, %v2416, %v2496
  %v2537 = vsel %vm2457, %v2417, %v2497
  %v2538 = vsel %vm2458, %v2418, %v2498
  %v2539 = vsel %vm2459, %v2419, %v2499
  %v2540 = vsel %vm2460, %v2420, %v2500
  %v2541 = vsel %vm2461, %v2421, %v2501
  %v2542 = vsel %vm2462, %v2422, %v2502
  %v2543 = vsel %vm2463, %v2423, %v2503
  %v2544 = vsel %vm2464, %v2424, %v2504
  %v2545 = vsel %vm2465, %v2425, %v2505
  %v2546 = vsel %vm2466, %v2426, %v2506
  %v2547 = vsel %vm2467, %v2427, %v2507
  %v2548 = vsel %vm2468, %v2428, %v2508
  %v2549 = vsel %vm2469, %v2429, %v2509
  %v2550 = vsel %vm2470, %v2430, %v2510
  %v2551 = vsel %vm2471, %v2431, %v2511
  %v2552 = vsel %vm2472, %v2432, %v2512
  %v2553 = vsel %vm2473, %v2433, %v2513
  %v2554 = vsel %vm2474, %v2434, %v2514
  %v2555 = vsel %vm2475, %v2435, %v2515
  %v2556 = vsel %vm2476, %v2436, %v2516
  %v2557 = vsel %vm2477, %v2437, %v2517
  %v2558 = vsel %vm2478, %v2438, %v2518
  %v2559 = vsel %vm2479, %v2439, %v2519
  %v2560 = vsel %vm2480, %v2440, %v2520
  %v2561 = vsel %vm2481, %v2441, %v2521
  %v2562 = vsel %vm2482, %v2442, %v2522
  %v2563 = vsel %vm2483, %v2443, %v2523
  %v2564 = vsel %vm2484, %v2444, %v2524
  %v2565 = vsel %vm2485, %v2445, %v2525
  %vm2566 = vcmask 64512
  %2567 = vst.msk [vmem:[%s3] sm:$0xff] %vm2566, %v2526
  %2568 = vst.msk [vmem:[%s3 + $0x8] sm:$0xff] %vm2566, %v2527
  %2569 = vst.msk [vmem:[%s3 + $0x10] sm:$0xff] %vm2566, %v2528
  %2570 = vst.msk [vmem:[%s3 + $0x18] sm:$0xff] %vm2566, %v2529
  %2571 = vst.msk [vmem:[%s3 + $0x20] sm:$0xff] %vm2566, %v2530
  %2572 = vst.msk [vmem:[%s3 + $0x28] sm:$0xff] %vm2566, %v2531
  %2573 = vst.msk [vmem:[%s3 + $0x30] sm:$0xff] %vm2566, %v2532
  %2574 = vst.msk [vmem:[%s3 + $0x38] sm:$0xff] %vm2566, %v2533
  %2575 = vst.msk [vmem:[%s3 + $0x40] sm:$0xff] %vm2566, %v2534
  %2576 = vst.msk [vmem:[%s3 + $0x48] sm:$0xff] %vm2566, %v2535
  %2577 = vst.msk [vmem:[%s3 + $0x50] sm:$0xff] %vm2566, %v2536
  %2578 = vst.msk [vmem:[%s3 + $0x58] sm:$0xff] %vm2566, %v2537
  %2579 = vst.msk [vmem:[%s3 + $0x60] sm:$0xff] %vm2566, %v2538
  %2580 = vst.msk [vmem:[%s3 + $0x68] sm:$0xff] %vm2566, %v2539
  %2581 = vst.msk [vmem:[%s3 + $0x70] sm:$0xff] %vm2566, %v2540
  %2582 = vst.msk [vmem:[%s3 + $0x78] sm:$0xff] %vm2566, %v2541
  %2583 = vst.msk [vmem:[%s3 + $0x80] sm:$0xff] %vm2566, %v2542
  %2584 = vst.msk [vmem:[%s3 + $0x88] sm:$0xff] %vm2566, %v2543
  %2585 = vst.msk [vmem:[%s3 + $0x90] sm:$0xff] %vm2566, %v2544
  %2586 = vst.msk [vmem:[%s3 + $0x98] sm:$0xff] %vm2566, %v2545
  %2587 = vst.msk [vmem:[%s3 + $0xa0] sm:$0xff] %vm2566, %v2546
  %2588 = vst.msk [vmem:[%s3 + $0xa8] sm:$0xff] %vm2566, %v2547
  %2589 = vst.msk [vmem:[%s3 + $0xb0] sm:$0xff] %vm2566, %v2548
  %2590 = vst.msk [vmem:[%s3 + $0xb8] sm:$0xff] %vm2566, %v2549
  %2591 = vst.msk [vmem:[%s3 + $0xc0] sm:$0xff] %vm2566, %v2550
  %2592 = vst.msk [vmem:[%s3 + $0xc8] sm:$0xff] %vm2566, %v2551
  %2593 = vst.msk [vmem:[%s3 + $0xd0] sm:$0xff] %vm2566, %v2552
  %2594 = vst.msk [vmem:[%s3 + $0xd8] sm:$0xff] %vm2566, %v2553
  %2595 = vst.msk [vmem:[%s3 + $0xe0] sm:$0xff] %vm2566, %v2554
  %2596 = vst.msk [vmem:[%s3 + $0xe8] sm:$0xff] %vm2566, %v2555
  %2597 = vst.msk [vmem:[%s3 + $0xf0] sm:$0xff] %vm2566, %v2556
  %2598 = vst.msk [vmem:[%s3 + $0xf8] sm:$0xff] %vm2566, %v2557
  %2599 = vst.msk [vmem:[%s3 + $0x100] sm:$0xff] %vm2566, %v2558
  %2600 = vst.msk [vmem:[%s3 + $0x108] sm:$0xff] %vm2566, %v2559
  %2601 = vst.msk [vmem:[%s3 + $0x110] sm:$0xff] %vm2566, %v2560
  %2602 = vst.msk [vmem:[%s3 + $0x118] sm:$0xff] %vm2566, %v2561
  %2603 = vst.msk [vmem:[%s3 + $0x120] sm:$0xff] %vm2566, %v2562
  %2604 = vst.msk [vmem:[%s3 + $0x128] sm:$0xff] %vm2566, %v2563
  %2605 = vst.msk [vmem:[%s3 + $0x130] sm:$0xff] %vm2566, %v2564
  %2606 = vst.msk [vmem:[%s3 + $0x138] sm:$0xff] %vm2566, %v2565
  // Predicated region
  $region14: #{tpu_custom_call.1} parent=0 // pred_check
    _
  $region15: #{tpu_custom_call.1} parent=0 // pred_check_branch
    %2608 = sbr.rel (0) target = $region17
  $region16: #{tpu_custom_call.1} parent=0 // pred_region
    _
  $region17: #{tpu_custom_call.1} parent=0 // pred_fallthru
    _
  // Predicated region
  $region18: #{tpu_custom_call.1} parent=0 // pred_check
    _
  $region19: #{tpu_custom_call.1} parent=0 // pred_check_branch
    %2610 = sbr.rel (0) target = $region21
  $region20: #{tpu_custom_call.1} parent=0 // pred_region
    _
  $region21: #{tpu_custom_call.1} parent=0 // pred_fallthru
    _

</llo_original>
